<compile_context>
chip_gen: v6e
topology: v6e:2x2x1
jax: 0.10.0
libtpu: 0.0.40
codegen_flags: <defaults>
</compile_context>

<pallas_src>
import math

import jax
import jax.numpy as jnp
from jax.experimental import pallas as pl
from jax.experimental.pallas import tpu as pltpu

# ----- small config consistent with ModelArgs (dim % n_head == 0, GQA) -----
DIM = 32
N_HEAD = 4
N_KV_HEAD = 2
HEAD_DIM = DIM // N_HEAD               # 8
KV_DIM = N_KV_HEAD * HEAD_DIM          # 16
TOTAL = DIM + 2 * KV_DIM               # 64  (q + k + v output rows of wqkv)
GQA_REP = N_HEAD // N_KV_HEAD          # 2
BATCH = 2
SEQLEN = 8
ROPE_BASE = 10000.0

# Packed per-head constant layout (rows x DIM columns). All offsets 8-aligned.
W_QKV_ROWS = 5 * HEAD_DIM              # 40: q | q_swap | k | k_swap | v
WO_OFF = W_QKV_ROWS                    # 40: per-head slice of Wo^T  (D x DIM)
COS_OFF = WO_OFF + HEAD_DIM            # 48: rope cos table          (S x D)
SIN_OFF = COS_OFF + SEQLEN             # 56: rope signed-sin table   (S x D)
PACK_ROWS = SIN_OFF + SEQLEN           # 64

assert HEAD_DIM % 8 == 0 and SEQLEN % 8 == 0, "packed row blocks must be 8-aligned"


# ---------------------------------------------------------------- fused kernel
def _attention_kernel(x_ref, w_ref, o_ref):
    """Fused qkv-proj + rotary + causal attention + out-proj for one batch entry.

    x_ref : (S, DIM)                  activations for this batch element
    w_ref : (N_HEAD, PACK_ROWS, DIM)  per-head packed weights + rope tables (f32)
    o_ref : (S, DIM)
    """
    x = x_ref[...]
    xb = jnp.broadcast_to(x, (N_HEAD, SEQLEN, DIM))        # leading-dim broadcast

    # One batched MXU matmul produces q | q_swapped | k | k_swapped | v for
    # every head.  GQA repeat, rotary pair-swap and the 1/sqrt(head_dim) scale
    # are all folded into the host-side weight packing.
    big = jax.lax.dot_general(
        xb, w_ref[:, :W_QKV_ROWS, :],
        (((2,), (2,)), ((0,), (0,))),
        preferred_element_type=jnp.float32)                # (H, S, 5*D)

    q = big[..., 0 * HEAD_DIM:1 * HEAD_DIM]
    q_sw = big[..., 1 * HEAD_DIM:2 * HEAD_DIM]
    k = big[..., 2 * HEAD_DIM:3 * HEAD_DIM]
    k_sw = big[..., 3 * HEAD_DIM:4 * HEAD_DIM]
    v = big[..., 4 * HEAD_DIM:5 * HEAD_DIM]

    # Rotary (elementwise): out[2i] = x[2i]*c - x[2i+1]*s ; out[2i+1] = x[2i+1]*c + x[2i]*s.
    # Pair swap lives in q_sw/k_sw; the sin table carries the alternating signs.
    cos = w_ref[:, COS_OFF:COS_OFF + SEQLEN, :HEAD_DIM]    # (H, S, D)  f32
    sin = w_ref[:, SIN_OFF:SIN_OFF + SEQLEN, :HEAD_DIM]    # (H, S, D)  f32
    q = q * cos + q_sw * sin
    k = k * cos + k_sw * sin

    # scores[h, i, j] = <q_i, k_j>   (scale already folded into the q weights)
    scores = jax.lax.dot_general(
        q, k, (((2,), (2,)), ((0,), (0,))),
        preferred_element_type=jnp.float32)                # (H, S, S)

    row = jax.lax.broadcasted_iota(jnp.int32, (SEQLEN, SEQLEN), 0)
    col = jax.lax.broadcasted_iota(jnp.int32, (SEQLEN, SEQLEN), 1)
    scores = jnp.where((col <= row)[None, :, :], scores,
                       jnp.finfo(jnp.float32).min)

    # Softmax stays in f32 (v5e has no bf16 VALU/EUP path).
    m = jnp.max(scores, axis=-1, keepdims=True)
    p = jnp.exp(scores - m)
    l = jnp.sum(p, axis=-1, keepdims=True)

    ctx = jax.lax.dot_general(
        p, v, (((2,), (1,)), ((0,), (0,))),
        preferred_element_type=jnp.float32)                # (H, S, D)
    ctx = ctx * pl.reciprocal(l, approx=True)              # EUP slot, frees VALU

    # Output projection: per-head partial products, summed over the leading
    # head axis (plain vreg adds) -> one lane-dense-ish (S, DIM) store.
    out_h = jax.lax.dot_general(
        ctx, w_ref[:, WO_OFF:WO_OFF + HEAD_DIM, :],
        (((2,), (1,)), ((0,), (0,))),
        preferred_element_type=jnp.float32)                # (H, S, DIM)
    o_ref[...] = jnp.sum(out_h, axis=0).astype(o_ref.dtype)
    # attn_dropout / resid_dropout are identity in eval mode.


# ---------------------------------------------------------------- host-side prep
def precompute_freqs_cis(seq_len, head_dim, base=10000.0):
    half = head_dim // 2
    freqs = 1.0 / (base ** (jnp.arange(0, half, dtype=jnp.float32) * 2.0 / head_dim))
    t = jnp.arange(seq_len, dtype=jnp.float32)
    angles = jnp.outer(t, freqs)                                   # (S, half)
    return jnp.stack([jnp.cos(angles), jnp.sin(angles)], axis=-1)  # (S, half, 2)


def make_attention_params(wqkv, wo, freqs_cis):
    """One-time weight / rope-table prepacking (hoisted out of the forward).

    wqkv: (TOTAL, DIM) torch Linear layout; wo: (DIM, DIM); freqs_cis: (S, D/2, 2).
    Returns wpack: (N_HEAD, PACK_ROWS, DIM) f32.
    """
    wqkv = jnp.asarray(wqkv, jnp.float32)
    wo = jnp.asarray(wo, jnp.float32)
    scale = 1.0 / math.sqrt(HEAD_DIM)
    swap = jnp.arange(HEAD_DIM) ^ 1                        # rotary pair swap

    cos = jnp.repeat(freqs_cis[..., 0], 2, axis=-1)        # (S, D): c0,c0,c1,c1,...
    sin = jnp.stack([-freqs_cis[..., 1], freqs_cis[..., 1]],
                    axis=-1).reshape(SEQLEN, HEAD_DIM)     # (S, D): -s0,+s0,-s1,+s1,...
    pad = jnp.zeros((SEQLEN, DIM - HEAD_DIM), jnp.float32)
    cos_blk = jnp.concatenate([cos, pad], axis=1)          # (S, DIM)
    sin_blk = jnp.concatenate([sin, pad], axis=1)

    blocks = []
    for h in range(N_HEAD):
        g = h // GQA_REP                                   # GQA folded into packing
        wq = wqkv[h * HEAD_DIM:(h + 1) * HEAD_DIM] * scale            # (D, DIM)
        wk = wqkv[DIM + g * HEAD_DIM:DIM + (g + 1) * HEAD_DIM]        # (D, DIM)
        wv = wqkv[DIM + KV_DIM + g * HEAD_DIM:
                  DIM + KV_DIM + (g + 1) * HEAD_DIM]                  # (D, DIM)
        wo_h = wo[:, h * HEAD_DIM:(h + 1) * HEAD_DIM].T               # (D, DIM)
        blocks.append(jnp.concatenate(
            [wq, wq[swap], wk, wk[swap], wv, wo_h, cos_blk, sin_blk], axis=0))
    return jnp.stack(blocks, axis=0)                       # (H, PACK_ROWS, DIM)


@jax.jit
def attention_forward(x, wpack):
    b, s, d = x.shape
    assert (b, s, d) == (BATCH, SEQLEN, DIM), "kernel is compiled for fixed shapes"
    assert wpack.shape == (N_HEAD, PACK_ROWS, DIM)
    return pl.pallas_call(
        _attention_kernel,
        out_shape=jax.ShapeDtypeStruct((b, s, DIM), x.dtype),
        grid=(b,),
        in_specs=[
            pl.BlockSpec((None, s, DIM), lambda i: (i, 0, 0)),               # x
            pl.BlockSpec((N_HEAD, PACK_ROWS, DIM), lambda i: (0, 0, 0)),     # consts
        ],
        out_specs=pl.BlockSpec((None, s, DIM), lambda i: (i, 0, 0)),
        compiler_params=pltpu.CompilerParams(
            dimension_semantics=("parallel",)),   # shards batch across both TCs on v7x
    )(x, wpack)


# ---------------------------------------------------------------- pure-JAX reference
def apply_rotary_emb(x, freqs_cis):
    # x: (B, S, H, D); freqs_cis: (S, D//2, 2) -- matches torch apply_rotary_emb
    xs = x.astype(jnp.float32).reshape(*x.shape[:-1], -1, 2)
    fc = freqs_cis.reshape(1, xs.shape[1], 1, xs.shape[3], 2)
    out_r = xs[..., 0] * fc[..., 0] - xs[..., 1] * fc[..., 1]
    out_i = xs[..., 1] * fc[..., 0] + xs[..., 0] * fc[..., 1]
    out = jnp.stack([out_r, out_i], axis=-1).reshape(x.shape)
    return out.astype(x.dtype)


def reference_forward(x, wqkv, wo, freqs_cis):
    b, s, _ = x.shape
    qkv = x @ wqkv.T
    xq, xk, xv = jnp.split(qkv, [DIM, DIM + KV_DIM], axis=-1)
    xq = apply_rotary_emb(xq.reshape(b, s, N_HEAD, HEAD_DIM), freqs_cis)
    xk = apply_rotary_emb(xk.reshape(b, s, N_KV_HEAD, HEAD_DIM), freqs_cis)
    xv = xv.reshape(b, s, N_KV_HEAD, HEAD_DIM)
    xq, xk, xv = (jnp.transpose(t, (0, 2, 1, 3)) for t in (xq, xk, xv))
    xk = jnp.repeat(xk, GQA_REP, axis=1)
    xv = jnp.repeat(xv, GQA_REP, axis=1)
    scores = jnp.einsum("bhqd,bhkd->bhqk", xq, xk) / math.sqrt(HEAD_DIM)
    mask = jnp.tril(jnp.ones((s, s), dtype=bool))
    scores = jnp.where(mask, scores, -jnp.inf)
    p = jax.nn.softmax(scores, axis=-1)
    out = jnp.einsum("bhqk,bhkd->bhqd", p, xv)
    out = jnp.transpose(out, (0, 2, 1, 3)).reshape(b, s, DIM)
    return out @ wo.T


if __name__ == "__main__":
    key = jax.random.PRNGKey(0)
    k1, k2, k3 = jax.random.split(key, 3)
    x = jax.random.normal(k1, (BATCH, SEQLEN, DIM), dtype=jnp.float32)
    wqkv = jax.random.normal(k2, (TOTAL, DIM), dtype=jnp.float32) * 0.02
    wo = jax.random.normal(k3, (DIM, DIM), dtype=jnp.float32) * 0.02
    freqs_cis = precompute_freqs_cis(SEQLEN, HEAD_DIM, ROPE_BASE)

    wpack = make_attention_params(wqkv, wo, freqs_cis)     # one-time model init
    out = jax.block_until_ready(attention_forward(x, wpack))

    ref = reference_forward(x, wqkv, wo, freqs_cis)
    assert out.shape == (BATCH, SEQLEN, DIM)
    assert jnp.allclose(out, ref, atol=2e-3, rtol=2e-3), "mismatch vs reference"
    print("KERNEL_OK")
</pallas_src>

<mosaic_0001>
module attributes {stable_mosaic.version = 11 : i64} {
  func.func @_attention_kernel(%arg0: i32, %arg1: memref<1x8x32xf32, #tpu.memory_space<vmem>>, %arg2: memref<4x64x32xf32, #tpu.memory_space<vmem>>, %arg3: memref<1x8x32xf32, #tpu.memory_space<vmem>>) attributes {dimension_semantics = [#tpu.dimension_semantics<parallel>], iteration_bounds = array<i64: 2>, scalar_prefetch = 0 : i64, scratch_operands = 0 : i64, tpu.core_type = #tpu.core_type<tc>, window_params = [{transform_indices = @transform_0, window_bounds = array<i64: 1, 8, 32>}, {pipeline_mode = #tpu.pipeline_mode<synchronous>, transform_indices = @transform_1, window_bounds = array<i64: 4, 64, 32>}, {transform_indices = @transform_2, window_bounds = array<i64: 1, 8, 32>}]} {
    %c0 = arith.constant 0 : index
    %c0_0 = arith.constant 0 : index
    %c0_1 = arith.constant 0 : index
    %0 = vector.load %arg1[%c0, %c0_0, %c0_1] : memref<1x8x32xf32, #tpu.memory_space<vmem>>, vector<1x8x32xf32>
    %1 = vector.shape_cast %0 : vector<1x8x32xf32> to vector<8x32xf32>
    %2 = vector.shape_cast %1 : vector<8x32xf32> to vector<1x8x32xf32>
    %3 = vector.broadcast %2 : vector<1x8x32xf32> to vector<4x8x32xf32>
    %c0_2 = arith.constant 0 : index
    %c0_3 = arith.constant 0 : index
    %c0_4 = arith.constant 0 : index
    %4 = vector.load %arg2[%c0_2, %c0_3, %c0_4] : memref<4x64x32xf32, #tpu.memory_space<vmem>>, vector<4x40x32xf32>
    %cst = arith.constant dense<0.000000e+00> : vector<4x8x40xf32>
    %5 = tpu.matmul %3, %4, %cst {dimension_numbers = #tpu.dot_dimension_numbers<[2], [2], [1], [1], [0, 0, 0, 1, 1, 1], [0], [0]>} : vector<4x8x32xf32>, vector<4x40x32xf32>, vector<4x8x40xf32> -> vector<4x8x40xf32>
    %6 = vector.extract_strided_slice %5 {offsets = [0, 0, 0], sizes = [4, 8, 8], strides = [1, 1, 1]} : vector<4x8x40xf32> to vector<4x8x8xf32>
    %7 = vector.extract_strided_slice %5 {offsets = [0, 0, 8], sizes = [4, 8, 8], strides = [1, 1, 1]} : vector<4x8x40xf32> to vector<4x8x8xf32>
    %8 = vector.extract_strided_slice %5 {offsets = [0, 0, 16], sizes = [4, 8, 8], strides = [1, 1, 1]} : vector<4x8x40xf32> to vector<4x8x8xf32>
    %9 = vector.extract_strided_slice %5 {offsets = [0, 0, 24], sizes = [4, 8, 8], strides = [1, 1, 1]} : vector<4x8x40xf32> to vector<4x8x8xf32>
    %10 = vector.extract_strided_slice %5 {offsets = [0, 0, 32], sizes = [4, 8, 8], strides = [1, 1, 1]} : vector<4x8x40xf32> to vector<4x8x8xf32>
    %c0_5 = arith.constant 0 : index
    %c48 = arith.constant 48 : index
    %c0_6 = arith.constant 0 : index
    %11 = vector.load %arg2[%c0_5, %c48, %c0_6] : memref<4x64x32xf32, #tpu.memory_space<vmem>>, vector<4x8x8xf32>
    %c0_7 = arith.constant 0 : index
    %c56 = arith.constant 56 : index
    %c0_8 = arith.constant 0 : index
    %12 = vector.load %arg2[%c0_7, %c56, %c0_8] : memref<4x64x32xf32, #tpu.memory_space<vmem>>, vector<4x8x8xf32>
    %13 = arith.mulf %6, %11 : vector<4x8x8xf32>
    %14 = arith.mulf %7, %12 : vector<4x8x8xf32>
    %15 = arith.addf %13, %14 : vector<4x8x8xf32>
    %16 = arith.mulf %8, %11 : vector<4x8x8xf32>
    %17 = arith.mulf %9, %12 : vector<4x8x8xf32>
    %18 = arith.addf %16, %17 : vector<4x8x8xf32>
    %cst_9 = arith.constant dense<0.000000e+00> : vector<4x8x8xf32>
    %19 = tpu.matmul %15, %18, %cst_9 {dimension_numbers = #tpu.dot_dimension_numbers<[2], [2], [1], [1], [0, 0, 0, 1, 1, 1], [0], [0]>} : vector<4x8x8xf32>, vector<4x8x8xf32>, vector<4x8x8xf32> -> vector<4x8x8xf32>
    %20 = tpu.iota {dimensions = array<i32: 0>} : vector<8x8xi32>
    %21 = tpu.iota {dimensions = array<i32: 1>} : vector<8x8xi32>
    %22 = arith.cmpi sle, %21, %20 : vector<8x8xi32>
    %23 = vector.shape_cast %22 : vector<8x8xi1> to vector<1x8x8xi1>
    %cst_10 = arith.constant -3.40282347E+38 : f32
    %24 = vector.shape_cast %23 : vector<1x8x8xi1> to vector<1x8x8xi1>
    %25 = vector.broadcast %24 : vector<1x8x8xi1> to vector<4x8x8xi1>
    %26 = vector.broadcast %cst_10 : f32 to vector<4x8x8xf32>
    %27 = arith.select %25, %19, %26 : vector<4x8x8xi1>, vector<4x8x8xf32>
    %cst_11 = arith.constant dense<0xFF800000> : vector<4x8xf32>
    %28 = vector.multi_reduction <maximumf>, %27, %cst_11 [2] : vector<4x8x8xf32> to vector<4x8xf32>
    %29 = vector.shape_cast %28 : vector<4x8xf32> to vector<4x8x1xf32>
    %30 = vector.broadcast %29 : vector<4x8x1xf32> to vector<4x8x8xf32>
    %31 = arith.subf %27, %30 : vector<4x8x8xf32>
    %32 = math.exp %31 : vector<4x8x8xf32>
    %cst_12 = arith.constant dense<0.000000e+00> : vector<4x8xf32>
    %33 = vector.multi_reduction <add>, %32, %cst_12 [2] : vector<4x8x8xf32> to vector<4x8xf32>
    %34 = vector.shape_cast %33 : vector<4x8xf32> to vector<4x8x1xf32>
    %cst_13 = arith.constant dense<0.000000e+00> : vector<4x8x8xf32>
    %35 = tpu.matmul %32, %10, %cst_13 {dimension_numbers = #tpu.dot_dimension_numbers<[2], [1], [1], [2], [0, 0, 0, 1, 1, 2], [0], [0]>} : vector<4x8x8xf32>, vector<4x8x8xf32>, vector<4x8x8xf32> -> vector<4x8x8xf32>
    %36 = tpu.reciprocal %34 {approx = true} : vector<4x8x1xf32> -> vector<4x8x1xf32>
    %37 = vector.broadcast %36 : vector<4x8x1xf32> to vector<4x8x8xf32>
    %38 = arith.mulf %35, %37 : vector<4x8x8xf32>
    %c0_14 = arith.constant 0 : index
    %c40 = arith.constant 40 : index
    %c0_15 = arith.constant 0 : index
    %39 = vector.load %arg2[%c0_14, %c40, %c0_15] : memref<4x64x32xf32, #tpu.memory_space<vmem>>, vector<4x8x32xf32>
    %cst_16 = arith.constant dense<0.000000e+00> : vector<4x8x32xf32>
    %40 = tpu.matmul %38, %39, %cst_16 {dimension_numbers = #tpu.dot_dimension_numbers<[2], [1], [1], [2], [0, 0, 0, 1, 1, 2], [0], [0]>} : vector<4x8x8xf32>, vector<4x8x32xf32>, vector<4x8x32xf32> -> vector<4x8x32xf32>
    %cst_17 = arith.constant dense<0.000000e+00> : vector<8x32xf32>
    %41 = vector.multi_reduction <add>, %40, %cst_17 [0] : vector<4x8x32xf32> to vector<8x32xf32>
    %c0_18 = arith.constant 0 : index
    %c0_19 = arith.constant 0 : index
    %c0_20 = arith.constant 0 : index
    %42 = vector.load %arg3[%c0_18, %c0_19, %c0_20] : memref<1x8x32xf32, #tpu.memory_space<vmem>>, vector<1x8x32xf32>
    %43 = vector.shape_cast %42 : vector<1x8x32xf32> to vector<8x32xf32>
    %44 = vector.shape_cast %41 : vector<8x32xf32> to vector<1x8x32xf32>
    tpu.vector_store %arg3[%c0_18, %c0_19, %c0_20], %44 {strides = array<i32>} : memref<1x8x32xf32, #tpu.memory_space<vmem>>, vector<1x8x32xf32>,
    return
  }
  func.func @transform_0(%arg0: i32) -> (i32, i32, i32) {
    %c0_i32 = arith.constant 0 : i32
    %c0_i32_0 = arith.constant 0 : i32
    %c0_i32_1 = arith.constant 0 : i32
    return %arg0, %c0_i32, %c0_i32_0 : i32, i32, i32
  }
  func.func @transform_1(%arg0: i32) -> (i32, i32, i32) {
    %c0_i32 = arith.constant 0 : i32
    %c0_i32_0 = arith.constant 0 : i32
    %c0_i32_1 = arith.constant 0 : i32
    %c0_i32_2 = arith.constant 0 : i32
    return %c0_i32, %c0_i32_0, %c0_i32_1 : i32, i32, i32
  }
  func.func @transform_2(%arg0: i32) -> (i32, i32, i32) {
    %c0_i32 = arith.constant 0 : i32
    %c0_i32_0 = arith.constant 0 : i32
    %c0_i32_1 = arith.constant 0 : i32
    return %arg0, %c0_i32, %c0_i32_0 : i32, i32, i32
  }
}

</mosaic_0001>

<llo_original>
// kernel: attention_forward.1
$region0: #{attention_forward.1}
  #allocation0 [shape = 'u32[]', space=smem, size = 0x4, offset = 0x4, fixed_abs, tag = 'smem constant byte address 0x4 - core index']
  #allocation1 [shape = 'u32[144,128]{1,0:T(1,128)}', space=vmem, size = 0x12000, scoped, tag = 'internal scratch']
  %s0 = inlined_call_operand.vmem [shape: f32[2,8,32], index: 0, kind: input, shape index: {}]
  %s1 = inlined_call_operand.vmem [shape: f32[4,64,32], index: 1, kind: input, shape index: {}]
  %s2 = inlined_call_operand.hbm [shape: f32[2,8,32], index: 2, kind: output, shape index: {}]
  %s3 = sld [smem:[#allocation0]]
  $region41: #{attention_forward.1} parent=0
    _
  %s5 = ssub.s32 1, %s3
  %s6 = scalar_select 0, %s5, %s3
  $region1: #{attention_forward.1} parent=0
    #allocation2 [shape = 'u8[8192]{0}', space=vmem, size = 0x2000, scoped, tag = 'output window, operand 0']
    #allocation3 [shape = 's32[2]{0}', space=sflag, size = 0x8, scoped, tag = 'scoped memory for attention_forward.1']
    %7 = vsyncpa [#allocation3], 0
    %s8 = scalar_lea.sflag [#allocation3], 1
    %9 = vsyncpa %s8, 0
    loop: start=0, step=1, limit=4
    $region2: #{attention_forward.1} parent=1 // loop_pre_header
      _
    $region3: #{attention_forward.1} parent=1 // loop_header
      %s11 = sphi 0, %s15
      %p12 = scmp.ge.s32.totalorder %s11, 4
      %s21 = sphi 0, %s23
      %s24 = sphi 0, %s21
      %s25 = sphi 0, %s24
      %s41 = sphi 0, %s25
      %s45 = sphi 0, %s45
      %s47 = sphi 0, %s45
      %s48 = sphi 0, %s47
      %s62 = sphi 0, %s48
      %s68 = sphi 0, %s70
      %s71 = sphi 0, %s68
      %s72 = sphi 0, %s71
      %s88 = sphi 0, %s72
    $region4: #{attention_forward.1} parent=1 // loop_header_branch
      %14 = sbr.rel (%p12) target = $region8
    $region5: #{attention_forward.1} parent=1 // loop_body
      %s16 = ssub.s32 %s11, 1
      %s17 = ssub.s32 %s11, 2
      %s18 = sadd.s32 %s11, 1
      %s19 = ssub.s32 %s11, %s18
      %p20 = scmp.eq.s32.totalorder %s19, 0
      %s22 = sadd.s32 %s21, 1
      %s23 = scalar_select %p20, %s21, %s22
      %p26 = pneg %p20
      %p27 = scmp.eq.s32.totalorder %s11, 1
      %p28 = por %p26, %p27
      %p29 = scmp.ne.s32.totalorder %s21, %s24
      %p30 = scmp.eq.s32.totalorder %s11, 0
      %p31 = por %p29, %p30
      %p32 = scmp.ne.s32.totalorder %s21, %s24
      %p33 = scmp.eq.s32.totalorder %s16, 1
      %p34 = por %p32, %p33
      %p35 = scmp.ne.s32.totalorder %s24, %s25
      %p36 = scmp.eq.s32.totalorder %s16, 0
      %p37 = por %p35, %p36
      %p38 = scmp.ne.s32.totalorder %s24, %s25
      %p39 = scmp.eq.s32.totalorder %s17, 1
      %p40 = por %p38, %p39
      %p42 = scmp.ne.s32.totalorder %s25, %s41
      %p43 = scmp.eq.s32.totalorder %s17, 0
      %p44 = por %p42, %p43
      %s46 = sadd.s32 %s45, 1
      %p49 = scmp.eq.s32.totalorder %s11, 1
      %p50 = scmp.ne.s32.totalorder %s45, %s47
      %p51 = scmp.eq.s32.totalorder %s11, 0
      %p52 = por %p50, %p51
      %p53 = scmp.ne.s32.totalorder %s45, %s47
      %p54 = scmp.eq.s32.totalorder %s16, 1
      %p55 = por %p53, %p54
      %p56 = scmp.ne.s32.totalorder %s47, %s48
      %p57 = scmp.eq.s32.totalorder %s16, 0
      %p58 = por %p56, %p57
      %p59 = scmp.ne.s32.totalorder %s47, %s48
      %p60 = scmp.eq.s32.totalorder %s17, 1
      %p61 = por %p59, %p60
      %p63 = scmp.ne.s32.totalorder %s48, %s62
      %p64 = scmp.eq.s32.totalorder %s17, 0
      %p65 = por %p63, %p64
      %s66 = ssub.s32 %s11, %s18
      %p67 = scmp.eq.s32.totalorder %s66, 0
      %s69 = sadd.s32 %s68, 1
      %s70 = scalar_select %p67, %s68, %s69
      %p73 = pneg %p67
      %p74 = scmp.eq.s32.totalorder %s11, 1
      %p75 = por %p73, %p74
      %p76 = scmp.ne.s32.totalorder %s68, %s71
      %p77 = scmp.eq.s32.totalorder %s11, 0
      %p78 = por %p76, %p77
      %p79 = scmp.ne.s32.totalorder %s68, %s71
      %p80 = scmp.eq.s32.totalorder %s16, 1
      %p81 = por %p79, %p80
      %p82 = scmp.ne.s32.totalorder %s71, %s72
      %p83 = scmp.eq.s32.totalorder %s16, 0
      %p84 = por %p82, %p83
      %p85 = scmp.ne.s32.totalorder %s71, %s72
      %p86 = scmp.eq.s32.totalorder %s17, 1
      %p87 = por %p85, %p86
      %p89 = scmp.ne.s32.totalorder %s72, %s88
      %p90 = scmp.eq.s32.totalorder %s17, 0
      %p91 = por %p89, %p90
      %p92 = scmp.le.s32.totalorder 1, %s11
      %p93 = scmp.lt.s32.totalorder %s11, 3
      %p94 = pnand %p92, %p93
      %p95 = pneg %p94
      // Predicated region
      $region9: #{attention_forward.1} parent=5 // pred_check
        _
      $region10: #{attention_forward.1} parent=5 // pred_check_branch
        %97 = sbr.rel (%p94) target = $region12
      $region11: #{attention_forward.1} parent=5 // pred_region
        %s98 = ssub.s32 %s11, 1
        // Predicated region
        $region13: #{attention_forward.1} parent=11 // pred_check
          %p99 = pneg %p58
        $region14: #{attention_forward.1} parent=11 // pred_check_branch
          %101 = sbr.rel (%p99) target = $region16
        $region15: #{attention_forward.1} parent=11 // pred_region
          _
        $region16: #{attention_forward.1} parent=11 // pred_fallthru
          _
      $region12: #{attention_forward.1} parent=5 // pred_fallthru
        _
      %p102 = scmp.lt.s32.totalorder %s11, 2
      // Predicated region
      $region17: #{attention_forward.1} parent=5 // pred_check
        %p103 = pneg %p102
      $region18: #{attention_forward.1} parent=5 // pred_check_branch
        %105 = sbr.rel (%p103) target = $region20
      $region19: #{attention_forward.1} parent=5 // pred_region
        // Predicated region
        $region21: #{attention_forward.1} parent=19 // pred_check
          %p106 = pneg %p31
        $region22: #{attention_forward.1} parent=19 // pred_check_branch
          %108 = sbr.rel (%p106) target = $region24
        $region23: #{attention_forward.1} parent=19 // pred_region
          %p109 = scmp.lt.s32.totalorder %s11, 1
          %s110 = scalar_select %p109, %s11, 1
          %s111 = smul.addr %s110, 8
          %s112 = scalar_lea.vmem %s0, %s111
        $region24: #{attention_forward.1} parent=19 // pred_fallthru
          _
      $region20: #{attention_forward.1} parent=5 // pred_fallthru
        _
      %p113 = scmp.le.s32.totalorder 1, %s11
      %p114 = scmp.lt.s32.totalorder %s11, 3
      %p115 = pnand %p113, %p114
      %p116 = pneg %p115
      // Predicated region
      $region25: #{attention_forward.1} parent=5 // pred_check
        _
      $region26: #{attention_forward.1} parent=5 // pred_check_branch
        %118 = sbr.rel (%p115) target = $region28
      $region27: #{attention_forward.1} parent=5 // pred_region
        %s119 = ssub.s32 %s11, 1
        %p120 = scmp.lt.s32.totalorder %s16, 1
        %s121 = scalar_select %p120, %s16, 1
        %s122 = smul.addr %s121, 8
        %s123 = scalar_lea.vmem %s0, %s122
        %p124 = pneg %p37
        %p125 = pneg %p34
        %p126 = pneg %p58
        %p127 = pneg %p55
        %p128 = pneg %p84
        %p129 = pneg %p81
        %s130 = sand.u32 %s71, 1
        %s131 = scalar_lea.sflag [#allocation3], %s130
        %s132 = sand.u32 %s71, 1
        %s133 = smul.addr %s132, 8
        %s134 = scalar_lea.vmem [#allocation2], %s133
        %p135 = scmp.lt.s32.totalorder %s16, 1
        %s136 = scalar_select %p135, %s16, 1
        %s137 = smul.addr %s136, 8
        %s138 = scalar_lea.vmem %s0, %s137
        %v139 = vld [vmem:[%s138] sm:$0xff]
        %v140 = vld [vmem:[%s1] sm:$0xff]
        %v141 = vld [vmem:[%s1 + $0x8] sm:$0xff]
        %v142 = vld [vmem:[%s1 + $0x10] sm:$0xff]
        %v143 = vld [vmem:[%s1 + $0x18] sm:$0xff]
        %v144 = vld [vmem:[%s1 + $0x20] sm:$0xff]
        %v145 = vld [vmem:[%s1 + $0x40] sm:$0xff]
        %v146 = vld [vmem:[%s1 + $0x48] sm:$0xff]
        %v147 = vld [vmem:[%s1 + $0x50] sm:$0xff]
        %v148 = vld [vmem:[%s1 + $0x58] sm:$0xff]
        %v149 = vld [vmem:[%s1 + $0x60] sm:$0xff]
        %v150 = vld [vmem:[%s1 + $0x80] sm:$0xff]
        %v151 = vld [vmem:[%s1 + $0x88] sm:$0xff]
        %v152 = vld [vmem:[%s1 + $0x90] sm:$0xff]
        %v153 = vld [vmem:[%s1 + $0x98] sm:$0xff]
        %v154 = vld [vmem:[%s1 + $0xa0] sm:$0xff]
        %v155 = vld [vmem:[%s1 + $0xc0] sm:$0xff]
        %v156 = vld [vmem:[%s1 + $0xc8] sm:$0xff]
        %v157 = vld [vmem:[%s1 + $0xd0] sm:$0xff]
        %v158 = vld [vmem:[%s1 + $0xd8] sm:$0xff]
        %v159 = vld [vmem:[%s1 + $0xe0] sm:$0xff]
        %vm160 = vcmask 261120
        %v162 = vsel %vm160, %v139, 0
        %v165 = vsel %vm160, %v140, 0
        %v168 = vsel %vm160, %v141, 0
        %v171 = vsel %vm160, %v142, 0
        %v174 = vsel %vm160, %v143, 0
        %v177 = vsel %vm160, %v144, 0
        %179 = vmatprep.subr.mxu0 0.0
        %180 = vmatpush1.xpose.msra.mxu0 0.0
        %181 = vmatprep.subr.mxu0 0.0
        %182 = vmatpush1.xpose.msra.mxu0 0.0
        %183 = vmatprep.subr.mxu0 0.0
        %184 = vmatpush1.xpose.msra.mxu0 0.0
        %185 = vmatprep.subr.mxu0 0.0
        %186 = vmatpush1.xpose.msra.mxu0 0.0
        %187 = vmatprep.subr.mxu0 0.0
        %188 = vmatpush1.xpose.msra.mxu0 0.0
        %189 = vmatprep.subr.mxu0 0.0
        %190 = vmatpush1.xpose.msra.mxu0 0.0
        %191 = vmatprep.subr.mxu0 0.0
        %192 = vmatpush1.xpose.msra.mxu0 0.0
        %193 = vmatprep.subr.mxu0 0.0
        %194 = vmatpush1.xpose.msra.mxu0 0.0
        %195 = vmatprep.subr.mxu0 0.0
        %196 = vmatpush1.xpose.msra.mxu0 0.0
        %197 = vmatprep.subr.mxu0 0.0
        %198 = vmatpush1.xpose.msra.mxu0 0.0
        %199 = vmatprep.subr.mxu0 0.0
        %200 = vmatpush1.xpose.msra.mxu0 0.0
        %201 = vmatprep.subr.mxu0 0.0
        %202 = vmatpush1.xpose.msra.mxu0 %v177
        %203 = vmatprep.subr.mxu0 0.0
        %204 = vmatpush1.xpose.msra.mxu0 %v174
        %205 = vmatprep.subr.mxu0 0.0
        %206 = vmatpush1.xpose.msra.mxu0 %v171
        %207 = vmatprep.subr.mxu0 0.0
        %208 = vmatpush1.xpose.msra.mxu0 %v168
        %209 = vmatprep.subr.mxu0 0.0
        %210 = vmatpush1.xpose.msra.mxu0 %v165
        %211 = vmatprep.subr.mxu0 0.0
        %212 = vmatpush2.xpose.msra.mxu0 0.0
        %213 = vmatprep.subr.mxu0 0.0
        %214 = vmatpush2.xpose.msra.mxu0 0.0
        %215 = vmatprep.subr.mxu0 0.0
        %216 = vmatpush2.xpose.msra.mxu0 0.0
        %217 = vmatprep.subr.mxu0 0.0
        %218 = vmatpush2.xpose.msra.mxu0 0.0
        %219 = vmatprep.subr.mxu0 0.0
        %220 = vmatpush2.xpose.msra.mxu0 0.0
        %221 = vmatprep.subr.mxu0 0.0
        %222 = vmatpush2.xpose.msra.mxu0 0.0
        %223 = vmatprep.subr.mxu0 0.0
        %224 = vmatpush2.xpose.msra.mxu0 0.0
        %225 = vmatprep.subr.mxu0 0.0
        %226 = vmatpush2.xpose.msra.mxu0 0.0
        %227 = vmatprep.subr.mxu0 0.0
        %228 = vmatpush2.xpose.msra.mxu0 0.0
        %229 = vmatprep.subr.mxu0 0.0
        %230 = vmatpush2.xpose.msra.mxu0 0.0
        %231 = vmatprep.subr.mxu0 0.0
        %232 = vmatpush2.xpose.msra.mxu0 0.0
        %233 = vmatprep.subr.mxu0 0.0
        %234 = vmatpush2.xpose.msra.mxu0 0.0
        %235 = vmatprep.subr.mxu0 0.0
        %236 = vmatpush2.xpose.msra.mxu0 0.0
        %237 = vmatprep.subr.mxu0 0.0
        %238 = vmatpush2.xpose.msra.mxu0 0.0
        %239 = vmatprep.subr.mxu0 0.0
        %240 = vmatpush2.xpose.msra.mxu0 0.0
        %241 = vmatprep.subr.mxu0 0.0
        %242 = vmatpush2.xpose.msra.mxu0 0.0
        %243 = vmatprep.mubr.f32.mxu0 0.0
        %244 = vmatmul.mubr.f32.gmra.mxu0 %v162
        %v245 = vpop.f32.mrf.mxu0
        %v246 = vadd.f32 0.0, %v245
        %v247 = vpop.f32.mrf.mxu0
        %248 = vdwg.mxu0
        %v250 = vsel %vm160, %v145, 0
        %v253 = vsel %vm160, %v146, 0
        %v256 = vsel %vm160, %v147, 0
        %v259 = vsel %vm160, %v148, 0
        %v262 = vsel %vm160, %v149, 0
        %264 = vmatprep.subr.mxu0 0.0
        %265 = vmatpush1.xpose.msra.mxu0 0.0
        %266 = vmatprep.subr.mxu0 0.0
        %267 = vmatpush1.xpose.msra.mxu0 0.0
        %268 = vmatprep.subr.mxu0 0.0
        %269 = vmatpush1.xpose.msra.mxu0 0.0
        %270 = vmatprep.subr.mxu0 0.0
        %271 = vmatpush1.xpose.msra.mxu0 0.0
        %272 = vmatprep.subr.mxu0 0.0
        %273 = vmatpush1.xpose.msra.mxu0 0.0
        %274 = vmatprep.subr.mxu0 0.0
        %275 = vmatpush1.xpose.msra.mxu0 0.0
        %276 = vmatprep.subr.mxu0 0.0
        %277 = vmatpush1.xpose.msra.mxu0 0.0
        %278 = vmatprep.subr.mxu0 0.0
        %279 = vmatpush1.xpose.msra.mxu0 0.0
        %280 = vmatprep.subr.mxu0 0.0
        %281 = vmatpush1.xpose.msra.mxu0 0.0
        %282 = vmatprep.subr.mxu0 0.0
        %283 = vmatpush1.xpose.msra.mxu0 0.0
        %284 = vmatprep.subr.mxu0 0.0
        %285 = vmatpush1.xpose.msra.mxu0 0.0
        %286 = vmatprep.subr.mxu0 0.0
        %287 = vmatpush1.xpose.msra.mxu0 %v262
        %288 = vmatprep.subr.mxu0 0.0
        %289 = vmatpush1.xpose.msra.mxu0 %v259
        %290 = vmatprep.subr.mxu0 0.0
        %291 = vmatpush1.xpose.msra.mxu0 %v256
        %292 = vmatprep.subr.mxu0 0.0
        %293 = vmatpush1.xpose.msra.mxu0 %v253
        %294 = vmatprep.subr.mxu0 0.0
        %295 = vmatpush1.xpose.msra.mxu0 %v250
        %296 = vmatprep.subr.mxu0 0.0
        %297 = vmatpush2.xpose.msra.mxu0 0.0
        %298 = vmatprep.subr.mxu0 0.0
        %299 = vmatpush2.xpose.msra.mxu0 0.0
        %300 = vmatprep.subr.mxu0 0.0
        %301 = vmatpush2.xpose.msra.mxu0 0.0
        %302 = vmatprep.subr.mxu0 0.0
        %303 = vmatpush2.xpose.msra.mxu0 0.0
        %304 = vmatprep.subr.mxu0 0.0
        %305 = vmatpush2.xpose.msra.mxu0 0.0
        %306 = vmatprep.subr.mxu0 0.0
        %307 = vmatpush2.xpose.msra.mxu0 0.0
        %308 = vmatprep.subr.mxu0 0.0
        %309 = vmatpush2.xpose.msra.mxu0 0.0
        %310 = vmatprep.subr.mxu0 0.0
        %311 = vmatpush2.xpose.msra.mxu0 0.0
        %312 = vmatprep.subr.mxu0 0.0
        %313 = vmatpush2.xpose.msra.mxu0 0.0
        %314 = vmatprep.subr.mxu0 0.0
        %315 = vmatpush2.xpose.msra.mxu0 0.0
        %316 = vmatprep.subr.mxu0 0.0
        %317 = vmatpush2.xpose.msra.mxu0 0.0
        %318 = vmatprep.subr.mxu0 0.0
        %319 = vmatpush2.xpose.msra.mxu0 0.0
        %320 = vmatprep.subr.mxu0 0.0
        %321 = vmatpush2.xpose.msra.mxu0 0.0
        %322 = vmatprep.subr.mxu0 0.0
        %323 = vmatpush2.xpose.msra.mxu0 0.0
        %324 = vmatprep.subr.mxu0 0.0
        %325 = vmatpush2.xpose.msra.mxu0 0.0
        %326 = vmatprep.subr.mxu0 0.0
        %327 = vmatpush2.xpose.msra.mxu0 0.0
        %328 = vmatprep.mubr.f32.mxu0 0.0
        %329 = vmatmul.mubr.f32.gmra.mxu0 %v162
        %v330 = vpop.f32.mrf.mxu0
        %v331 = vadd.f32 0.0, %v330
        %v332 = vpop.f32.mrf.mxu0
        %333 = vdwg.mxu0
        %v335 = vsel %vm160, %v150, 0
        %v338 = vsel %vm160, %v151, 0
        %v341 = vsel %vm160, %v152, 0
        %v344 = vsel %vm160, %v153, 0
        %v347 = vsel %vm160, %v154, 0
        %349 = vmatprep.subr.mxu0 0.0
        %350 = vmatpush1.xpose.msra.mxu0 0.0
        %351 = vmatprep.subr.mxu0 0.0
        %352 = vmatpush1.xpose.msra.mxu0 0.0
        %353 = vmatprep.subr.mxu0 0.0
        %354 = vmatpush1.xpose.msra.mxu0 0.0
        %355 = vmatprep.subr.mxu0 0.0
        %356 = vmatpush1.xpose.msra.mxu0 0.0
        %357 = vmatprep.subr.mxu0 0.0
        %358 = vmatpush1.xpose.msra.mxu0 0.0
        %359 = vmatprep.subr.mxu0 0.0
        %360 = vmatpush1.xpose.msra.mxu0 0.0
        %361 = vmatprep.subr.mxu0 0.0
        %362 = vmatpush1.xpose.msra.mxu0 0.0
        %363 = vmatprep.subr.mxu0 0.0
        %364 = vmatpush1.xpose.msra.mxu0 0.0
        %365 = vmatprep.subr.mxu0 0.0
        %366 = vmatpush1.xpose.msra.mxu0 0.0
        %367 = vmatprep.subr.mxu0 0.0
        %368 = vmatpush1.xpose.msra.mxu0 0.0
        %369 = vmatprep.subr.mxu0 0.0
        %370 = vmatpush1.xpose.msra.mxu0 0.0
        %371 = vmatprep.subr.mxu0 0.0
        %372 = vmatpush1.xpose.msra.mxu0 %v347
        %373 = vmatprep.subr.mxu0 0.0
        %374 = vmatpush1.xpose.msra.mxu0 %v344
        %375 = vmatprep.subr.mxu0 0.0
        %376 = vmatpush1.xpose.msra.mxu0 %v341
        %377 = vmatprep.subr.mxu0 0.0
        %378 = vmatpush1.xpose.msra.mxu0 %v338
        %379 = vmatprep.subr.mxu0 0.0
        %380 = vmatpush1.xpose.msra.mxu0 %v335
        %381 = vmatprep.subr.mxu0 0.0
        %382 = vmatpush2.xpose.msra.mxu0 0.0
        %383 = vmatprep.subr.mxu0 0.0
        %384 = vmatpush2.xpose.msra.mxu0 0.0
        %385 = vmatprep.subr.mxu0 0.0
        %386 = vmatpush2.xpose.msra.mxu0 0.0
        %387 = vmatprep.subr.mxu0 0.0
        %388 = vmatpush2.xpose.msra.mxu0 0.0
        %389 = vmatprep.subr.mxu0 0.0
        %390 = vmatpush2.xpose.msra.mxu0 0.0
        %391 = vmatprep.subr.mxu0 0.0
        %392 = vmatpush2.xpose.msra.mxu0 0.0
        %393 = vmatprep.subr.mxu0 0.0
        %394 = vmatpush2.xpose.msra.mxu0 0.0
        %395 = vmatprep.subr.mxu0 0.0
        %396 = vmatpush2.xpose.msra.mxu0 0.0
        %397 = vmatprep.subr.mxu0 0.0
        %398 = vmatpush2.xpose.msra.mxu0 0.0
        %399 = vmatprep.subr.mxu0 0.0
        %400 = vmatpush2.xpose.msra.mxu0 0.0
        %401 = vmatprep.subr.mxu0 0.0
        %402 = vmatpush2.xpose.msra.mxu0 0.0
        %403 = vmatprep.subr.mxu0 0.0
        %404 = vmatpush2.xpose.msra.mxu0 0.0
        %405 = vmatprep.subr.mxu0 0.0
        %406 = vmatpush2.xpose.msra.mxu0 0.0
        %407 = vmatprep.subr.mxu0 0.0
        %408 = vmatpush2.xpose.msra.mxu0 0.0
        %409 = vmatprep.subr.mxu0 0.0
        %410 = vmatpush2.xpose.msra.mxu0 0.0
        %411 = vmatprep.subr.mxu0 0.0
        %412 = vmatpush2.xpose.msra.mxu0 0.0
        %413 = vmatprep.mubr.f32.mxu0 0.0
        %414 = vmatmul.mubr.f32.gmra.mxu0 %v162
        %v415 = vpop.f32.mrf.mxu0
        %v416 = vadd.f32 0.0, %v415
        %v417 = vpop.f32.mrf.mxu0
        %418 = vdwg.mxu0
        %v420 = vsel %vm160, %v155, 0
        %v423 = vsel %vm160, %v156, 0
        %v426 = vsel %vm160, %v157, 0
        %v429 = vsel %vm160, %v158, 0
        %v432 = vsel %vm160, %v159, 0
        %434 = vmatprep.subr.mxu0 0.0
        %435 = vmatpush1.xpose.msra.mxu0 0.0
        %436 = vmatprep.subr.mxu0 0.0
        %437 = vmatpush1.xpose.msra.mxu0 0.0
        %438 = vmatprep.subr.mxu0 0.0
        %439 = vmatpush1.xpose.msra.mxu0 0.0
        %440 = vmatprep.subr.mxu0 0.0
        %441 = vmatpush1.xpose.msra.mxu0 0.0
        %442 = vmatprep.subr.mxu0 0.0
        %443 = vmatpush1.xpose.msra.mxu0 0.0
        %444 = vmatprep.subr.mxu0 0.0
        %445 = vmatpush1.xpose.msra.mxu0 0.0
        %446 = vmatprep.subr.mxu0 0.0
        %447 = vmatpush1.xpose.msra.mxu0 0.0
        %448 = vmatprep.subr.mxu0 0.0
        %449 = vmatpush1.xpose.msra.mxu0 0.0
        %450 = vmatprep.subr.mxu0 0.0
        %451 = vmatpush1.xpose.msra.mxu0 0.0
        %452 = vmatprep.subr.mxu0 0.0
        %453 = vmatpush1.xpose.msra.mxu0 0.0
        %454 = vmatprep.subr.mxu0 0.0
        %455 = vmatpush1.xpose.msra.mxu0 0.0
        %456 = vmatprep.subr.mxu0 0.0
        %457 = vmatpush1.xpose.msra.mxu0 %v432
        %458 = vmatprep.subr.mxu0 0.0
        %459 = vmatpush1.xpose.msra.mxu0 %v429
        %460 = vmatprep.subr.mxu0 0.0
        %461 = vmatpush1.xpose.msra.mxu0 %v426
        %462 = vmatprep.subr.mxu0 0.0
        %463 = vmatpush1.xpose.msra.mxu0 %v423
        %464 = vmatprep.subr.mxu0 0.0
        %465 = vmatpush1.xpose.msra.mxu0 %v420
        %466 = vmatprep.subr.mxu0 0.0
        %467 = vmatpush2.xpose.msra.mxu0 0.0
        %468 = vmatprep.subr.mxu0 0.0
        %469 = vmatpush2.xpose.msra.mxu0 0.0
        %470 = vmatprep.subr.mxu0 0.0
        %471 = vmatpush2.xpose.msra.mxu0 0.0
        %472 = vmatprep.subr.mxu0 0.0
        %473 = vmatpush2.xpose.msra.mxu0 0.0
        %474 = vmatprep.subr.mxu0 0.0
        %475 = vmatpush2.xpose.msra.mxu0 0.0
        %476 = vmatprep.subr.mxu0 0.0
        %477 = vmatpush2.xpose.msra.mxu0 0.0
        %478 = vmatprep.subr.mxu0 0.0
        %479 = vmatpush2.xpose.msra.mxu0 0.0
        %480 = vmatprep.subr.mxu0 0.0
        %481 = vmatpush2.xpose.msra.mxu0 0.0
        %482 = vmatprep.subr.mxu0 0.0
        %483 = vmatpush2.xpose.msra.mxu0 0.0
        %484 = vmatprep.subr.mxu0 0.0
        %485 = vmatpush2.xpose.msra.mxu0 0.0
        %486 = vmatprep.subr.mxu0 0.0
        %487 = vmatpush2.xpose.msra.mxu0 0.0
        %488 = vmatprep.subr.mxu0 0.0
        %489 = vmatpush2.xpose.msra.mxu0 0.0
        %490 = vmatprep.subr.mxu0 0.0
        %491 = vmatpush2.xpose.msra.mxu0 0.0
        %492 = vmatprep.subr.mxu0 0.0
        %493 = vmatpush2.xpose.msra.mxu0 0.0
        %494 = vmatprep.subr.mxu0 0.0
        %495 = vmatpush2.xpose.msra.mxu0 0.0
        %496 = vmatprep.subr.mxu0 0.0
        %497 = vmatpush2.xpose.msra.mxu0 0.0
        %498 = vmatprep.mubr.f32.mxu0 0.0
        %499 = vmatmul.mubr.f32.gmra.mxu0 %v162
        %v500 = vpop.f32.mrf.mxu0
        %v501 = vadd.f32 0.0, %v500
        %v502 = vpop.f32.mrf.mxu0
        %503 = vdwg.mxu0
        %v504 = vld [vmem:[%s1 + $0x30] sm:$0xff]
        %v505 = vld [vmem:[%s1 + $0x70] sm:$0xff]
        %v506 = vld [vmem:[%s1 + $0xb0] sm:$0xff]
        %v507 = vld [vmem:[%s1 + $0xf0] sm:$0xff]
        %v508 = vld [vmem:[%s1 + $0x38] sm:$0xff]
        %v509 = vld [vmem:[%s1 + $0x78] sm:$0xff]
        %v510 = vld [vmem:[%s1 + $0xb8] sm:$0xff]
        %v511 = vld [vmem:[%s1 + $0xf8] sm:$0xff]
        %v512 = vmul.f32 %v246, %v504
        %v513 = vmul.f32 %v331, %v505
        %v514 = vmul.f32 %v416, %v506
        %v515 = vmul.f32 %v501, %v507
        %520 = vrot.lane.b32.xlu0 %v508, 8
        %v521 = vpop.permute.xlu0 %520
        %522 = vrot.lane.b32.xlu0 %v509, 8
        %v523 = vpop.permute.xlu0 %522
        %524 = vrot.lane.b32.xlu0 %v510, 8
        %v525 = vpop.permute.xlu0 %524
        %526 = vrot.lane.b32.xlu0 %v511, 8
        %v527 = vpop.permute.xlu0 %526
        %v532 = vmul.f32 %v246, %v521
        %v533 = vmul.f32 %v331, %v523
        %v534 = vmul.f32 %v416, %v525
        %v535 = vmul.f32 %v501, %v527
        %540 = vrot.lane.b32.xlu0 %v532, 120
        %v541 = vpop.permute.xlu0 %540
        %542 = vrot.lane.b32.xlu0 %v533, 120
        %v543 = vpop.permute.xlu0 %542
        %544 = vrot.lane.b32.xlu0 %v534, 120
        %v545 = vpop.permute.xlu0 %544
        %546 = vrot.lane.b32.xlu0 %v535, 120
        %v547 = vpop.permute.xlu0 %546
        %v552 = vadd.f32 %v512, %v541
        %v553 = vadd.f32 %v513, %v543
        %v554 = vadd.f32 %v514, %v545
        %v555 = vadd.f32 %v515, %v547
        %560 = vrot.lane.b32.xlu0 %v504, 16
        %v561 = vpop.permute.xlu0 %560
        %562 = vrot.lane.b32.xlu0 %v505, 16
        %v563 = vpop.permute.xlu0 %562
        %564 = vrot.lane.b32.xlu0 %v506, 16
        %v565 = vpop.permute.xlu0 %564
        %566 = vrot.lane.b32.xlu0 %v507, 16
        %v567 = vpop.permute.xlu0 %566
        %v572 = vmul.f32 %v246, %v561
        %v573 = vmul.f32 %v331, %v563
        %v574 = vmul.f32 %v416, %v565
        %v575 = vmul.f32 %v501, %v567
        %576 = vrot.lane.b32.xlu0 %v508, 24
        %v577 = vpop.permute.xlu0 %576
        %578 = vrot.lane.b32.xlu0 %v509, 24
        %v579 = vpop.permute.xlu0 %578
        %580 = vrot.lane.b32.xlu0 %v510, 24
        %v581 = vpop.permute.xlu0 %580
        %582 = vrot.lane.b32.xlu0 %v511, 24
        %v583 = vpop.permute.xlu0 %582
        %v588 = vmul.f32 %v246, %v577
        %v589 = vmul.f32 %v331, %v579
        %v590 = vmul.f32 %v416, %v581
        %v591 = vmul.f32 %v501, %v583
        %596 = vrot.lane.b32.xlu0 %v588, 120
        %v597 = vpop.permute.xlu0 %596
        %598 = vrot.lane.b32.xlu0 %v589, 120
        %v599 = vpop.permute.xlu0 %598
        %600 = vrot.lane.b32.xlu0 %v590, 120
        %v601 = vpop.permute.xlu0 %600
        %602 = vrot.lane.b32.xlu0 %v591, 120
        %v603 = vpop.permute.xlu0 %602
        %v608 = vadd.f32 %v572, %v597
        %v609 = vadd.f32 %v573, %v599
        %v610 = vadd.f32 %v574, %v601
        %v611 = vadd.f32 %v575, %v603
        %613 = vrot.lane.b32.xlu0 %v608, 112
        %v614 = vpop.permute.xlu0 %613
        %vm615 = vcmask 64512
        %v617 = vsel %vm615, %v552, 0
        %v619 = vsel %vm615, %v614, 0
        %621 = vmatprep.subr.mxu0 0.0
        %622 = vmatpush1.xpose.msra.mxu0 0.0
        %623 = vmatprep.subr.mxu0 0.0
        %624 = vmatpush1.xpose.msra.mxu0 0.0
        %625 = vmatprep.subr.mxu0 0.0
        %626 = vmatpush1.xpose.msra.mxu0 0.0
        %627 = vmatprep.subr.mxu0 0.0
        %628 = vmatpush1.xpose.msra.mxu0 0.0
        %629 = vmatprep.subr.mxu0 0.0
        %630 = vmatpush1.xpose.msra.mxu0 0.0
        %631 = vmatprep.subr.mxu0 0.0
        %632 = vmatpush1.xpose.msra.mxu0 0.0
        %633 = vmatprep.subr.mxu0 0.0
        %634 = vmatpush1.xpose.msra.mxu0 0.0
        %635 = vmatprep.subr.mxu0 0.0
        %636 = vmatpush1.xpose.msra.mxu0 0.0
        %637 = vmatprep.subr.mxu0 0.0
        %638 = vmatpush1.xpose.msra.mxu0 0.0
        %639 = vmatprep.subr.mxu0 0.0
        %640 = vmatpush1.xpose.msra.mxu0 0.0
        %641 = vmatprep.subr.mxu0 0.0
        %642 = vmatpush1.xpose.msra.mxu0 0.0
        %643 = vmatprep.subr.mxu0 0.0
        %644 = vmatpush1.xpose.msra.mxu0 0.0
        %645 = vmatprep.subr.mxu0 0.0
        %646 = vmatpush1.xpose.msra.mxu0 0.0
        %647 = vmatprep.subr.mxu0 0.0
        %648 = vmatpush1.xpose.msra.mxu0 0.0
        %649 = vmatprep.subr.mxu0 0.0
        %650 = vmatpush1.xpose.msra.mxu0 0.0
        %651 = vmatprep.subr.mxu0 0.0
        %652 = vmatpush1.xpose.msra.mxu0 %v619
        %653 = vmatprep.subr.mxu0 0.0
        %654 = vmatpush2.xpose.msra.mxu0 0.0
        %655 = vmatprep.subr.mxu0 0.0
        %656 = vmatpush2.xpose.msra.mxu0 0.0
        %657 = vmatprep.subr.mxu0 0.0
        %658 = vmatpush2.xpose.msra.mxu0 0.0
        %659 = vmatprep.subr.mxu0 0.0
        %660 = vmatpush2.xpose.msra.mxu0 0.0
        %661 = vmatprep.subr.mxu0 0.0
        %662 = vmatpush2.xpose.msra.mxu0 0.0
        %663 = vmatprep.subr.mxu0 0.0
        %664 = vmatpush2.xpose.msra.mxu0 0.0
        %665 = vmatprep.subr.mxu0 0.0
        %666 = vmatpush2.xpose.msra.mxu0 0.0
        %667 = vmatprep.subr.mxu0 0.0
        %668 = vmatpush2.xpose.msra.mxu0 0.0
        %669 = vmatprep.subr.mxu0 0.0
        %670 = vmatpush2.xpose.msra.mxu0 0.0
        %671 = vmatprep.subr.mxu0 0.0
        %672 = vmatpush2.xpose.msra.mxu0 0.0
        %673 = vmatprep.subr.mxu0 0.0
        %674 = vmatpush2.xpose.msra.mxu0 0.0
        %675 = vmatprep.subr.mxu0 0.0
        %676 = vmatpush2.xpose.msra.mxu0 0.0
        %677 = vmatprep.subr.mxu0 0.0
        %678 = vmatpush2.xpose.msra.mxu0 0.0
        %679 = vmatprep.subr.mxu0 0.0
        %680 = vmatpush2.xpose.msra.mxu0 0.0
        %681 = vmatprep.subr.mxu0 0.0
        %682 = vmatpush2.xpose.msra.mxu0 0.0
        %683 = vmatprep.subr.mxu0 0.0
        %684 = vmatpush2.xpose.msra.mxu0 0.0
        %685 = vmatprep.mubr.f32.mxu0 0.0
        %686 = vmatmul.mubr.f32.gmra.mxu0 %v617
        %v687 = vpop.f32.mrf.mxu0
        %v688 = vadd.f32 0.0, %v687
        %v689 = vpop.f32.mrf.mxu0
        %690 = vdwg.mxu0
        %692 = vrot.lane.b32.xlu0 %v609, 112
        %v693 = vpop.permute.xlu0 %692
        %v695 = vsel %vm615, %v553, 0
        %v697 = vsel %vm615, %v693, 0
        %699 = vmatprep.subr.mxu0 0.0
        %700 = vmatpush1.xpose.msra.mxu0 0.0
        %701 = vmatprep.subr.mxu0 0.0
        %702 = vmatpush1.xpose.msra.mxu0 0.0
        %703 = vmatprep.subr.mxu0 0.0
        %704 = vmatpush1.xpose.msra.mxu0 0.0
        %705 = vmatprep.subr.mxu0 0.0
        %706 = vmatpush1.xpose.msra.mxu0 0.0
        %707 = vmatprep.subr.mxu0 0.0
        %708 = vmatpush1.xpose.msra.mxu0 0.0
        %709 = vmatprep.subr.mxu0 0.0
        %710 = vmatpush1.xpose.msra.mxu0 0.0
        %711 = vmatprep.subr.mxu0 0.0
        %712 = vmatpush1.xpose.msra.mxu0 0.0
        %713 = vmatprep.subr.mxu0 0.0
        %714 = vmatpush1.xpose.msra.mxu0 0.0
        %715 = vmatprep.subr.mxu0 0.0
        %716 = vmatpush1.xpose.msra.mxu0 0.0
        %717 = vmatprep.subr.mxu0 0.0
        %718 = vmatpush1.xpose.msra.mxu0 0.0
        %719 = vmatprep.subr.mxu0 0.0
        %720 = vmatpush1.xpose.msra.mxu0 0.0
        %721 = vmatprep.subr.mxu0 0.0
        %722 = vmatpush1.xpose.msra.mxu0 0.0
        %723 = vmatprep.subr.mxu0 0.0
        %724 = vmatpush1.xpose.msra.mxu0 0.0
        %725 = vmatprep.subr.mxu0 0.0
        %726 = vmatpush1.xpose.msra.mxu0 0.0
        %727 = vmatprep.subr.mxu0 0.0
        %728 = vmatpush1.xpose.msra.mxu0 0.0
        %729 = vmatprep.subr.mxu0 0.0
        %730 = vmatpush1.xpose.msra.mxu0 %v697
        %731 = vmatprep.subr.mxu0 0.0
        %732 = vmatpush2.xpose.msra.mxu0 0.0
        %733 = vmatprep.subr.mxu0 0.0
        %734 = vmatpush2.xpose.msra.mxu0 0.0
        %735 = vmatprep.subr.mxu0 0.0
        %736 = vmatpush2.xpose.msra.mxu0 0.0
        %737 = vmatprep.subr.mxu0 0.0
        %738 = vmatpush2.xpose.msra.mxu0 0.0
        %739 = vmatprep.subr.mxu0 0.0
        %740 = vmatpush2.xpose.msra.mxu0 0.0
        %741 = vmatprep.subr.mxu0 0.0
        %742 = vmatpush2.xpose.msra.mxu0 0.0
        %743 = vmatprep.subr.mxu0 0.0
        %744 = vmatpush2.xpose.msra.mxu0 0.0
        %745 = vmatprep.subr.mxu0 0.0
        %746 = vmatpush2.xpose.msra.mxu0 0.0
        %747 = vmatprep.subr.mxu0 0.0
        %748 = vmatpush2.xpose.msra.mxu0 0.0
        %749 = vmatprep.subr.mxu0 0.0
        %750 = vmatpush2.xpose.msra.mxu0 0.0
        %751 = vmatprep.subr.mxu0 0.0
        %752 = vmatpush2.xpose.msra.mxu0 0.0
        %753 = vmatprep.subr.mxu0 0.0
        %754 = vmatpush2.xpose.msra.mxu0 0.0
        %755 = vmatprep.subr.mxu0 0.0
        %756 = vmatpush2.xpose.msra.mxu0 0.0
        %757 = vmatprep.subr.mxu0 0.0
        %758 = vmatpush2.xpose.msra.mxu0 0.0
        %759 = vmatprep.subr.mxu0 0.0
        %760 = vmatpush2.xpose.msra.mxu0 0.0
        %761 = vmatprep.subr.mxu0 0.0
        %762 = vmatpush2.xpose.msra.mxu0 0.0
        %763 = vmatprep.mubr.f32.mxu0 0.0
        %764 = vmatmul.mubr.f32.gmra.mxu0 %v695
        %v765 = vpop.f32.mrf.mxu0
        %v766 = vadd.f32 0.0, %v765
        %v767 = vpop.f32.mrf.mxu0
        %768 = vdwg.mxu0
        %770 = vrot.lane.b32.xlu0 %v610, 112
        %v771 = vpop.permute.xlu0 %770
        %v773 = vsel %vm615, %v554, 0
        %v775 = vsel %vm615, %v771, 0
        %777 = vmatprep.subr.mxu0 0.0
        %778 = vmatpush1.xpose.msra.mxu0 0.0
        %779 = vmatprep.subr.mxu0 0.0
        %780 = vmatpush1.xpose.msra.mxu0 0.0
        %781 = vmatprep.subr.mxu0 0.0
        %782 = vmatpush1.xpose.msra.mxu0 0.0
        %783 = vmatprep.subr.mxu0 0.0
        %784 = vmatpush1.xpose.msra.mxu0 0.0
        %785 = vmatprep.subr.mxu0 0.0
        %786 = vmatpush1.xpose.msra.mxu0 0.0
        %787 = vmatprep.subr.mxu0 0.0
        %788 = vmatpush1.xpose.msra.mxu0 0.0
        %789 = vmatprep.subr.mxu0 0.0
        %790 = vmatpush1.xpose.msra.mxu0 0.0
        %791 = vmatprep.subr.mxu0 0.0
        %792 = vmatpush1.xpose.msra.mxu0 0.0
        %793 = vmatprep.subr.mxu0 0.0
        %794 = vmatpush1.xpose.msra.mxu0 0.0
        %795 = vmatprep.subr.mxu0 0.0
        %796 = vmatpush1.xpose.msra.mxu0 0.0
        %797 = vmatprep.subr.mxu0 0.0
        %798 = vmatpush1.xpose.msra.mxu0 0.0
        %799 = vmatprep.subr.mxu0 0.0
        %800 = vmatpush1.xpose.msra.mxu0 0.0
        %801 = vmatprep.subr.mxu0 0.0
        %802 = vmatpush1.xpose.msra.mxu0 0.0
        %803 = vmatprep.subr.mxu0 0.0
        %804 = vmatpush1.xpose.msra.mxu0 0.0
        %805 = vmatprep.subr.mxu0 0.0
        %806 = vmatpush1.xpose.msra.mxu0 0.0
        %807 = vmatprep.subr.mxu0 0.0
        %808 = vmatpush1.xpose.msra.mxu0 %v775
        %809 = vmatprep.subr.mxu0 0.0
        %810 = vmatpush2.xpose.msra.mxu0 0.0
        %811 = vmatprep.subr.mxu0 0.0
        %812 = vmatpush2.xpose.msra.mxu0 0.0
        %813 = vmatprep.subr.mxu0 0.0
        %814 = vmatpush2.xpose.msra.mxu0 0.0
        %815 = vmatprep.subr.mxu0 0.0
        %816 = vmatpush2.xpose.msra.mxu0 0.0
        %817 = vmatprep.subr.mxu0 0.0
        %818 = vmatpush2.xpose.msra.mxu0 0.0
        %819 = vmatprep.subr.mxu0 0.0
        %820 = vmatpush2.xpose.msra.mxu0 0.0
        %821 = vmatprep.subr.mxu0 0.0
        %822 = vmatpush2.xpose.msra.mxu0 0.0
        %823 = vmatprep.subr.mxu0 0.0
        %824 = vmatpush2.xpose.msra.mxu0 0.0
        %825 = vmatprep.subr.mxu0 0.0
        %826 = vmatpush2.xpose.msra.mxu0 0.0
        %827 = vmatprep.subr.mxu0 0.0
        %828 = vmatpush2.xpose.msra.mxu0 0.0
        %829 = vmatprep.subr.mxu0 0.0
        %830 = vmatpush2.xpose.msra.mxu0 0.0
        %831 = vmatprep.subr.mxu0 0.0
        %832 = vmatpush2.xpose.msra.mxu0 0.0
        %833 = vmatprep.subr.mxu0 0.0
        %834 = vmatpush2.xpose.msra.mxu0 0.0
        %835 = vmatprep.subr.mxu0 0.0
        %836 = vmatpush2.xpose.msra.mxu0 0.0
        %837 = vmatprep.subr.mxu0 0.0
        %838 = vmatpush2.xpose.msra.mxu0 0.0
        %839 = vmatprep.subr.mxu0 0.0
        %840 = vmatpush2.xpose.msra.mxu0 0.0
        %841 = vmatprep.mubr.f32.mxu0 0.0
        %842 = vmatmul.mubr.f32.gmra.mxu0 %v773
        %v843 = vpop.f32.mrf.mxu0
        %v844 = vadd.f32 0.0, %v843
        %v845 = vpop.f32.mrf.mxu0
        %846 = vdwg.mxu0
        %848 = vrot.lane.b32.xlu0 %v611, 112
        %v849 = vpop.permute.xlu0 %848
        %v851 = vsel %vm615, %v555, 0
        %v853 = vsel %vm615, %v849, 0
        %855 = vmatprep.subr.mxu0 0.0
        %856 = vmatpush1.xpose.msra.mxu0 0.0
        %857 = vmatprep.subr.mxu0 0.0
        %858 = vmatpush1.xpose.msra.mxu0 0.0
        %859 = vmatprep.subr.mxu0 0.0
        %860 = vmatpush1.xpose.msra.mxu0 0.0
        %861 = vmatprep.subr.mxu0 0.0
        %862 = vmatpush1.xpose.msra.mxu0 0.0
        %863 = vmatprep.subr.mxu0 0.0
        %864 = vmatpush1.xpose.msra.mxu0 0.0
        %865 = vmatprep.subr.mxu0 0.0
        %866 = vmatpush1.xpose.msra.mxu0 0.0
        %867 = vmatprep.subr.mxu0 0.0
        %868 = vmatpush1.xpose.msra.mxu0 0.0
        %869 = vmatprep.subr.mxu0 0.0
        %870 = vmatpush1.xpose.msra.mxu0 0.0
        %871 = vmatprep.subr.mxu0 0.0
        %872 = vmatpush1.xpose.msra.mxu0 0.0
        %873 = vmatprep.subr.mxu0 0.0
        %874 = vmatpush1.xpose.msra.mxu0 0.0
        %875 = vmatprep.subr.mxu0 0.0
        %876 = vmatpush1.xpose.msra.mxu0 0.0
        %877 = vmatprep.subr.mxu0 0.0
        %878 = vmatpush1.xpose.msra.mxu0 0.0
        %879 = vmatprep.subr.mxu0 0.0
        %880 = vmatpush1.xpose.msra.mxu0 0.0
        %881 = vmatprep.subr.mxu0 0.0
        %882 = vmatpush1.xpose.msra.mxu0 0.0
        %883 = vmatprep.subr.mxu0 0.0
        %884 = vmatpush1.xpose.msra.mxu0 0.0
        %885 = vmatprep.subr.mxu0 0.0
        %886 = vmatpush1.xpose.msra.mxu0 %v853
        %887 = vmatprep.subr.mxu0 0.0
        %888 = vmatpush2.xpose.msra.mxu0 0.0
        %889 = vmatprep.subr.mxu0 0.0
        %890 = vmatpush2.xpose.msra.mxu0 0.0
        %891 = vmatprep.subr.mxu0 0.0
        %892 = vmatpush2.xpose.msra.mxu0 0.0
        %893 = vmatprep.subr.mxu0 0.0
        %894 = vmatpush2.xpose.msra.mxu0 0.0
        %895 = vmatprep.subr.mxu0 0.0
        %896 = vmatpush2.xpose.msra.mxu0 0.0
        %897 = vmatprep.subr.mxu0 0.0
        %898 = vmatpush2.xpose.msra.mxu0 0.0
        %899 = vmatprep.subr.mxu0 0.0
        %900 = vmatpush2.xpose.msra.mxu0 0.0
        %901 = vmatprep.subr.mxu0 0.0
        %902 = vmatpush2.xpose.msra.mxu0 0.0
        %903 = vmatprep.subr.mxu0 0.0
        %904 = vmatpush2.xpose.msra.mxu0 0.0
        %905 = vmatprep.subr.mxu0 0.0
        %906 = vmatpush2.xpose.msra.mxu0 0.0
        %907 = vmatprep.subr.mxu0 0.0
        %908 = vmatpush2.xpose.msra.mxu0 0.0
        %909 = vmatprep.subr.mxu0 0.0
        %910 = vmatpush2.xpose.msra.mxu0 0.0
        %911 = vmatprep.subr.mxu0 0.0
        %912 = vmatpush2.xpose.msra.mxu0 0.0
        %913 = vmatprep.subr.mxu0 0.0
        %914 = vmatpush2.xpose.msra.mxu0 0.0
        %915 = vmatprep.subr.mxu0 0.0
        %916 = vmatpush2.xpose.msra.mxu0 0.0
        %917 = vmatprep.subr.mxu0 0.0
        %918 = vmatpush2.xpose.msra.mxu0 0.0
        %919 = vmatprep.mubr.f32.mxu0 0.0
        %920 = vmatmul.mubr.f32.gmra.mxu0 %v851
        %v921 = vpop.f32.mrf.mxu0
        %v922 = vadd.f32 0.0, %v921
        %v923 = vpop.f32.mrf.mxu0
        %924 = vdwg.mxu0
        %v925 = vlaneseq
        %v926 = vshrl.u32 %v925, 7
        %v927 = vlaneseq
        %v928 = vand.u32 %v927, 127
        %vm929 = vcmp.le.s32.totalorder %v928, %v926
        %v930 = vsel %vm929, 1, 0
        %vm931 = vcmp.eq.s32.totalorder %v930, 1
        %v932 = vsel %vm931, %v688, -3.4028235e+38
        %v933 = vsel %vm931, %v766, -3.4028235e+38
        %v934 = vsel %vm931, %v844, -3.4028235e+38
        %v935 = vsel %vm931, %v922, -3.4028235e+38
        %v936 = vsel %vm615, %v932, -inf
        %937 = vmax.xlane.f32.xlu0 %v936
        %v938 = vpop.xlane.xlu0 %937
        %v939 = vsel %vm615, %v933, -inf
        %940 = vmax.xlane.f32.xlu0 %v939
        %v941 = vpop.xlane.xlu0 %940
        %v942 = vsel %vm615, %v934, -inf
        %943 = vmax.xlane.f32.xlu0 %v942
        %v944 = vpop.xlane.xlu0 %943
        %v945 = vsel %vm615, %v935, -inf
        %946 = vmax.xlane.f32.xlu0 %v945
        %v947 = vpop.xlane.xlu0 %946
        %v948 = vsub.f32 %v932, %v938
        %v949 = vsub.f32 %v933, %v941
        %v950 = vsub.f32 %v934, %v944
        %v951 = vsub.f32 %v935, %v947
        %v952 = vmul.f32 %v948, 1.442695
        %v953 = vpow.pop %v952
        %v954 = vmul.f32 %v949, 1.442695
        %v955 = vpow.pop %v954
        %v956 = vmul.f32 %v950, 1.442695
        %v957 = vpow.pop %v956
        %v958 = vmul.f32 %v951, 1.442695
        %v959 = vpow.pop %v958
        %v960 = vsel %vm615, %v953, 0.0
        %961 = vadd.xlane.f32.xlu0 %v960
        %v962 = vpop.xlane.xlu0 %961
        %v963 = vsel %vm615, %v955, 0.0
        %964 = vadd.xlane.f32.xlu0 %v963
        %v965 = vpop.xlane.xlu0 %964
        %v966 = vsel %vm615, %v957, 0.0
        %967 = vadd.xlane.f32.xlu0 %v966
        %v968 = vpop.xlane.xlu0 %967
        %v969 = vsel %vm615, %v959, 0.0
        %970 = vadd.xlane.f32.xlu0 %v969
        %v971 = vpop.xlane.xlu0 %970
        %973 = vrot.lane.b32.xlu0 %v246, 96
        %v974 = vpop.permute.xlu0 %973
        %v977 = vsel %vm615, %v953, 0
        %979 = vmatprep.subr.mxu0 0.0
        %980 = vmatpush1.msra.mxu0 0.0
        %981 = vmatprep.subr.mxu0 0.0
        %982 = vmatpush1.msra.mxu0 0.0
        %983 = vmatprep.subr.mxu0 0.0
        %984 = vmatpush1.msra.mxu0 0.0
        %985 = vmatprep.subr.mxu0 0.0
        %986 = vmatpush1.msra.mxu0 0.0
        %987 = vmatprep.subr.mxu0 0.0
        %988 = vmatpush1.msra.mxu0 0.0
        %989 = vmatprep.subr.mxu0 0.0
        %990 = vmatpush1.msra.mxu0 0.0
        %991 = vmatprep.subr.mxu0 0.0
        %992 = vmatpush1.msra.mxu0 0.0
        %993 = vmatprep.subr.mxu0 0.0
        %994 = vmatpush1.msra.mxu0 0.0
        %995 = vmatprep.subr.mxu0 0.0
        %996 = vmatpush1.msra.mxu0 0.0
        %997 = vmatprep.subr.mxu0 0.0
        %998 = vmatpush1.msra.mxu0 0.0
        %999 = vmatprep.subr.mxu0 0.0
        %1000 = vmatpush1.msra.mxu0 0.0
        %1001 = vmatprep.subr.mxu0 0.0
        %1002 = vmatpush1.msra.mxu0 0.0
        %1003 = vmatprep.subr.mxu0 0.0
        %1004 = vmatpush1.msra.mxu0 0.0
        %1005 = vmatprep.subr.mxu0 0.0
        %1006 = vmatpush1.msra.mxu0 0.0
        %1007 = vmatprep.subr.mxu0 0.0
        %1008 = vmatpush1.msra.mxu0 0.0
        %1009 = vmatprep.subr.mxu0 0.0
        %1010 = vmatpush1.msra.mxu0 %v974
        %1011 = vmatprep.subr.mxu0 0.0
        %1012 = vmatpush2.msra.mxu0 0.0
        %1013 = vmatprep.subr.mxu0 0.0
        %1014 = vmatpush2.msra.mxu0 0.0
        %1015 = vmatprep.subr.mxu0 0.0
        %1016 = vmatpush2.msra.mxu0 0.0
        %1017 = vmatprep.subr.mxu0 0.0
        %1018 = vmatpush2.msra.mxu0 0.0
        %1019 = vmatprep.subr.mxu0 0.0
        %1020 = vmatpush2.msra.mxu0 0.0
        %1021 = vmatprep.subr.mxu0 0.0
        %1022 = vmatpush2.msra.mxu0 0.0
        %1023 = vmatprep.subr.mxu0 0.0
        %1024 = vmatpush2.msra.mxu0 0.0
        %1025 = vmatprep.subr.mxu0 0.0
        %1026 = vmatpush2.msra.mxu0 0.0
        %1027 = vmatprep.subr.mxu0 0.0
        %1028 = vmatpush2.msra.mxu0 0.0
        %1029 = vmatprep.subr.mxu0 0.0
        %1030 = vmatpush2.msra.mxu0 0.0
        %1031 = vmatprep.subr.mxu0 0.0
        %1032 = vmatpush2.msra.mxu0 0.0
        %1033 = vmatprep.subr.mxu0 0.0
        %1034 = vmatpush2.msra.mxu0 0.0
        %1035 = vmatprep.subr.mxu0 0.0
        %1036 = vmatpush2.msra.mxu0 0.0
        %1037 = vmatprep.subr.mxu0 0.0
        %1038 = vmatpush2.msra.mxu0 0.0
        %1039 = vmatprep.subr.mxu0 0.0
        %1040 = vmatpush2.msra.mxu0 0.0
        %1041 = vmatprep.subr.mxu0 0.0
        %1042 = vmatpush2.msra.mxu0 0.0
        %1043 = vmatprep.mubr.f32.mxu0 0.0
        %1044 = vmatmul.mubr.f32.gmra.mxu0 %v977
        %v1045 = vpop.f32.mrf.mxu0
        %v1046 = vadd.f32 0.0, %v1045
        %v1047 = vpop.f32.mrf.mxu0
        %1048 = vdwg.mxu0
        %1050 = vrot.lane.b32.xlu0 %v331, 96
        %v1051 = vpop.permute.xlu0 %1050
        %v1054 = vsel %vm615, %v955, 0
        %1056 = vmatprep.subr.mxu0 0.0
        %1057 = vmatpush1.msra.mxu0 0.0
        %1058 = vmatprep.subr.mxu0 0.0
        %1059 = vmatpush1.msra.mxu0 0.0
        %1060 = vmatprep.subr.mxu0 0.0
        %1061 = vmatpush1.msra.mxu0 0.0
        %1062 = vmatprep.subr.mxu0 0.0
        %1063 = vmatpush1.msra.mxu0 0.0
        %1064 = vmatprep.subr.mxu0 0.0
        %1065 = vmatpush1.msra.mxu0 0.0
        %1066 = vmatprep.subr.mxu0 0.0
        %1067 = vmatpush1.msra.mxu0 0.0
        %1068 = vmatprep.subr.mxu0 0.0
        %1069 = vmatpush1.msra.mxu0 0.0
        %1070 = vmatprep.subr.mxu0 0.0
        %1071 = vmatpush1.msra.mxu0 0.0
        %1072 = vmatprep.subr.mxu0 0.0
        %1073 = vmatpush1.msra.mxu0 0.0
        %1074 = vmatprep.subr.mxu0 0.0
        %1075 = vmatpush1.msra.mxu0 0.0
        %1076 = vmatprep.subr.mxu0 0.0
        %1077 = vmatpush1.msra.mxu0 0.0
        %1078 = vmatprep.subr.mxu0 0.0
        %1079 = vmatpush1.msra.mxu0 0.0
        %1080 = vmatprep.subr.mxu0 0.0
        %1081 = vmatpush1.msra.mxu0 0.0
        %1082 = vmatprep.subr.mxu0 0.0
        %1083 = vmatpush1.msra.mxu0 0.0
        %1084 = vmatprep.subr.mxu0 0.0
        %1085 = vmatpush1.msra.mxu0 0.0
        %1086 = vmatprep.subr.mxu0 0.0
        %1087 = vmatpush1.msra.mxu0 %v1051
        %1088 = vmatprep.subr.mxu0 0.0
        %1089 = vmatpush2.msra.mxu0 0.0
        %1090 = vmatprep.subr.mxu0 0.0
        %1091 = vmatpush2.msra.mxu0 0.0
        %1092 = vmatprep.subr.mxu0 0.0
        %1093 = vmatpush2.msra.mxu0 0.0
        %1094 = vmatprep.subr.mxu0 0.0
        %1095 = vmatpush2.msra.mxu0 0.0
        %1096 = vmatprep.subr.mxu0 0.0
        %1097 = vmatpush2.msra.mxu0 0.0
        %1098 = vmatprep.subr.mxu0 0.0
        %1099 = vmatpush2.msra.mxu0 0.0
        %1100 = vmatprep.subr.mxu0 0.0
        %1101 = vmatpush2.msra.mxu0 0.0
        %1102 = vmatprep.subr.mxu0 0.0
        %1103 = vmatpush2.msra.mxu0 0.0
        %1104 = vmatprep.subr.mxu0 0.0
        %1105 = vmatpush2.msra.mxu0 0.0
        %1106 = vmatprep.subr.mxu0 0.0
        %1107 = vmatpush2.msra.mxu0 0.0
        %1108 = vmatprep.subr.mxu0 0.0
        %1109 = vmatpush2.msra.mxu0 0.0
        %1110 = vmatprep.subr.mxu0 0.0
        %1111 = vmatpush2.msra.mxu0 0.0
        %1112 = vmatprep.subr.mxu0 0.0
        %1113 = vmatpush2.msra.mxu0 0.0
        %1114 = vmatprep.subr.mxu0 0.0
        %1115 = vmatpush2.msra.mxu0 0.0
        %1116 = vmatprep.subr.mxu0 0.0
        %1117 = vmatpush2.msra.mxu0 0.0
        %1118 = vmatprep.subr.mxu0 0.0
        %1119 = vmatpush2.msra.mxu0 0.0
        %1120 = vmatprep.mubr.f32.mxu0 0.0
        %1121 = vmatmul.mubr.f32.gmra.mxu0 %v1054
        %v1122 = vpop.f32.mrf.mxu0
        %v1123 = vadd.f32 0.0, %v1122
        %v1124 = vpop.f32.mrf.mxu0
        %1125 = vdwg.mxu0
        %1127 = vrot.lane.b32.xlu0 %v416, 96
        %v1128 = vpop.permute.xlu0 %1127
        %v1131 = vsel %vm615, %v957, 0
        %1133 = vmatprep.subr.mxu0 0.0
        %1134 = vmatpush1.msra.mxu0 0.0
        %1135 = vmatprep.subr.mxu0 0.0
        %1136 = vmatpush1.msra.mxu0 0.0
        %1137 = vmatprep.subr.mxu0 0.0
        %1138 = vmatpush1.msra.mxu0 0.0
        %1139 = vmatprep.subr.mxu0 0.0
        %1140 = vmatpush1.msra.mxu0 0.0
        %1141 = vmatprep.subr.mxu0 0.0
        %1142 = vmatpush1.msra.mxu0 0.0
        %1143 = vmatprep.subr.mxu0 0.0
        %1144 = vmatpush1.msra.mxu0 0.0
        %1145 = vmatprep.subr.mxu0 0.0
        %1146 = vmatpush1.msra.mxu0 0.0
        %1147 = vmatprep.subr.mxu0 0.0
        %1148 = vmatpush1.msra.mxu0 0.0
        %1149 = vmatprep.subr.mxu0 0.0
        %1150 = vmatpush1.msra.mxu0 0.0
        %1151 = vmatprep.subr.mxu0 0.0
        %1152 = vmatpush1.msra.mxu0 0.0
        %1153 = vmatprep.subr.mxu0 0.0
        %1154 = vmatpush1.msra.mxu0 0.0
        %1155 = vmatprep.subr.mxu0 0.0
        %1156 = vmatpush1.msra.mxu0 0.0
        %1157 = vmatprep.subr.mxu0 0.0
        %1158 = vmatpush1.msra.mxu0 0.0
        %1159 = vmatprep.subr.mxu0 0.0
        %1160 = vmatpush1.msra.mxu0 0.0
        %1161 = vmatprep.subr.mxu0 0.0
        %1162 = vmatpush1.msra.mxu0 0.0
        %1163 = vmatprep.subr.mxu0 0.0
        %1164 = vmatpush1.msra.mxu0 %v1128
        %1165 = vmatprep.subr.mxu0 0.0
        %1166 = vmatpush2.msra.mxu0 0.0
        %1167 = vmatprep.subr.mxu0 0.0
        %1168 = vmatpush2.msra.mxu0 0.0
        %1169 = vmatprep.subr.mxu0 0.0
        %1170 = vmatpush2.msra.mxu0 0.0
        %1171 = vmatprep.subr.mxu0 0.0
        %1172 = vmatpush2.msra.mxu0 0.0
        %1173 = vmatprep.subr.mxu0 0.0
        %1174 = vmatpush2.msra.mxu0 0.0
        %1175 = vmatprep.subr.mxu0 0.0
        %1176 = vmatpush2.msra.mxu0 0.0
        %1177 = vmatprep.subr.mxu0 0.0
        %1178 = vmatpush2.msra.mxu0 0.0
        %1179 = vmatprep.subr.mxu0 0.0
        %1180 = vmatpush2.msra.mxu0 0.0
        %1181 = vmatprep.subr.mxu0 0.0
        %1182 = vmatpush2.msra.mxu0 0.0
        %1183 = vmatprep.subr.mxu0 0.0
        %1184 = vmatpush2.msra.mxu0 0.0
        %1185 = vmatprep.subr.mxu0 0.0
        %1186 = vmatpush2.msra.mxu0 0.0
        %1187 = vmatprep.subr.mxu0 0.0
        %1188 = vmatpush2.msra.mxu0 0.0
        %1189 = vmatprep.subr.mxu0 0.0
        %1190 = vmatpush2.msra.mxu0 0.0
        %1191 = vmatprep.subr.mxu0 0.0
        %1192 = vmatpush2.msra.mxu0 0.0
        %1193 = vmatprep.subr.mxu0 0.0
        %1194 = vmatpush2.msra.mxu0 0.0
        %1195 = vmatprep.subr.mxu0 0.0
        %1196 = vmatpush2.msra.mxu0 0.0
        %1197 = vmatprep.mubr.f32.mxu0 0.0
        %1198 = vmatmul.mubr.f32.gmra.mxu0 %v1131
        %v1199 = vpop.f32.mrf.mxu0
        %v1200 = vadd.f32 0.0, %v1199
        %v1201 = vpop.f32.mrf.mxu0
        %1202 = vdwg.mxu0
        %1204 = vrot.lane.b32.xlu0 %v501, 96
        %v1205 = vpop.permute.xlu0 %1204
        %v1208 = vsel %vm615, %v959, 0
        %1210 = vmatprep.subr.mxu0 0.0
        %1211 = vmatpush1.msra.mxu0 0.0
        %1212 = vmatprep.subr.mxu0 0.0
        %1213 = vmatpush1.msra.mxu0 0.0
        %1214 = vmatprep.subr.mxu0 0.0
        %1215 = vmatpush1.msra.mxu0 0.0
        %1216 = vmatprep.subr.mxu0 0.0
        %1217 = vmatpush1.msra.mxu0 0.0
        %1218 = vmatprep.subr.mxu0 0.0
        %1219 = vmatpush1.msra.mxu0 0.0
        %1220 = vmatprep.subr.mxu0 0.0
        %1221 = vmatpush1.msra.mxu0 0.0
        %1222 = vmatprep.subr.mxu0 0.0
        %1223 = vmatpush1.msra.mxu0 0.0
        %1224 = vmatprep.subr.mxu0 0.0
        %1225 = vmatpush1.msra.mxu0 0.0
        %1226 = vmatprep.subr.mxu0 0.0
        %1227 = vmatpush1.msra.mxu0 0.0
        %1228 = vmatprep.subr.mxu0 0.0
        %1229 = vmatpush1.msra.mxu0 0.0
        %1230 = vmatprep.subr.mxu0 0.0
        %1231 = vmatpush1.msra.mxu0 0.0
        %1232 = vmatprep.subr.mxu0 0.0
        %1233 = vmatpush1.msra.mxu0 0.0
        %1234 = vmatprep.subr.mxu0 0.0
        %1235 = vmatpush1.msra.mxu0 0.0
        %1236 = vmatprep.subr.mxu0 0.0
        %1237 = vmatpush1.msra.mxu0 0.0
        %1238 = vmatprep.subr.mxu0 0.0
        %1239 = vmatpush1.msra.mxu0 0.0
        %1240 = vmatprep.subr.mxu0 0.0
        %1241 = vmatpush1.msra.mxu0 %v1205
        %1242 = vmatprep.subr.mxu0 0.0
        %1243 = vmatpush2.msra.mxu0 0.0
        %1244 = vmatprep.subr.mxu0 0.0
        %1245 = vmatpush2.msra.mxu0 0.0
        %1246 = vmatprep.subr.mxu0 0.0
        %1247 = vmatpush2.msra.mxu0 0.0
        %1248 = vmatprep.subr.mxu0 0.0
        %1249 = vmatpush2.msra.mxu0 0.0
        %1250 = vmatprep.subr.mxu0 0.0
        %1251 = vmatpush2.msra.mxu0 0.0
        %1252 = vmatprep.subr.mxu0 0.0
        %1253 = vmatpush2.msra.mxu0 0.0
        %1254 = vmatprep.subr.mxu0 0.0
        %1255 = vmatpush2.msra.mxu0 0.0
        %1256 = vmatprep.subr.mxu0 0.0
        %1257 = vmatpush2.msra.mxu0 0.0
        %1258 = vmatprep.subr.mxu0 0.0
        %1259 = vmatpush2.msra.mxu0 0.0
        %1260 = vmatprep.subr.mxu0 0.0
        %1261 = vmatpush2.msra.mxu0 0.0
        %1262 = vmatprep.subr.mxu0 0.0
        %1263 = vmatpush2.msra.mxu0 0.0
        %1264 = vmatprep.subr.mxu0 0.0
        %1265 = vmatpush2.msra.mxu0 0.0
        %1266 = vmatprep.subr.mxu0 0.0
        %1267 = vmatpush2.msra.mxu0 0.0
        %1268 = vmatprep.subr.mxu0 0.0
        %1269 = vmatpush2.msra.mxu0 0.0
        %1270 = vmatprep.subr.mxu0 0.0
        %1271 = vmatpush2.msra.mxu0 0.0
        %1272 = vmatprep.subr.mxu0 0.0
        %1273 = vmatpush2.msra.mxu0 0.0
        %1274 = vmatprep.mubr.f32.mxu0 0.0
        %1275 = vmatmul.mubr.f32.gmra.mxu0 %v1208
        %v1276 = vpop.f32.mrf.mxu0
        %v1277 = vadd.f32 0.0, %v1276
        %v1278 = vpop.f32.mrf.mxu0
        %1279 = vdwg.mxu0
        %v1280 = vrcp.pop %v962
        %v1281 = vrcp.pop %v965
        %v1282 = vrcp.pop %v968
        %v1283 = vrcp.pop %v971
        %v1284 = vmul.f32 %v1046, %v1280
        %v1285 = vmul.f32 %v1123, %v1281
        %v1286 = vmul.f32 %v1200, %v1282
        %v1287 = vmul.f32 %v1277, %v1283
        %v1288 = vld [vmem:[%s1 + $0x28] sm:$0xff]
        %v1289 = vld [vmem:[%s1 + $0x68] sm:$0xff]
        %v1290 = vld [vmem:[%s1 + $0xa8] sm:$0xff]
        %v1291 = vld [vmem:[%s1 + $0xe8] sm:$0xff]
        %v1293 = vsel %vm615, %v1284, 0
        %1295 = vmatprep.subr.mxu0 0.0
        %1296 = vmatpush1.msra.mxu0 0.0
        %1297 = vmatprep.subr.mxu0 0.0
        %1298 = vmatpush1.msra.mxu0 0.0
        %1299 = vmatprep.subr.mxu0 0.0
        %1300 = vmatpush1.msra.mxu0 0.0
        %1301 = vmatprep.subr.mxu0 0.0
        %1302 = vmatpush1.msra.mxu0 0.0
        %1303 = vmatprep.subr.mxu0 0.0
        %1304 = vmatpush1.msra.mxu0 0.0
        %1305 = vmatprep.subr.mxu0 0.0
        %1306 = vmatpush1.msra.mxu0 0.0
        %1307 = vmatprep.subr.mxu0 0.0
        %1308 = vmatpush1.msra.mxu0 0.0
        %1309 = vmatprep.subr.mxu0 0.0
        %1310 = vmatpush1.msra.mxu0 0.0
        %1311 = vmatprep.subr.mxu0 0.0
        %1312 = vmatpush1.msra.mxu0 0.0
        %1313 = vmatprep.subr.mxu0 0.0
        %1314 = vmatpush1.msra.mxu0 0.0
        %1315 = vmatprep.subr.mxu0 0.0
        %1316 = vmatpush1.msra.mxu0 0.0
        %1317 = vmatprep.subr.mxu0 0.0
        %1318 = vmatpush1.msra.mxu0 0.0
        %1319 = vmatprep.subr.mxu0 0.0
        %1320 = vmatpush1.msra.mxu0 0.0
        %1321 = vmatprep.subr.mxu0 0.0
        %1322 = vmatpush1.msra.mxu0 0.0
        %1323 = vmatprep.subr.mxu0 0.0
        %1324 = vmatpush1.msra.mxu0 0.0
        %1325 = vmatprep.subr.mxu0 0.0
        %1326 = vmatpush1.msra.mxu0 %v1288
        %1327 = vmatprep.subr.mxu0 0.0
        %1328 = vmatpush2.msra.mxu0 0.0
        %1329 = vmatprep.subr.mxu0 0.0
        %1330 = vmatpush2.msra.mxu0 0.0
        %1331 = vmatprep.subr.mxu0 0.0
        %1332 = vmatpush2.msra.mxu0 0.0
        %1333 = vmatprep.subr.mxu0 0.0
        %1334 = vmatpush2.msra.mxu0 0.0
        %1335 = vmatprep.subr.mxu0 0.0
        %1336 = vmatpush2.msra.mxu0 0.0
        %1337 = vmatprep.subr.mxu0 0.0
        %1338 = vmatpush2.msra.mxu0 0.0
        %1339 = vmatprep.subr.mxu0 0.0
        %1340 = vmatpush2.msra.mxu0 0.0
        %1341 = vmatprep.subr.mxu0 0.0
        %1342 = vmatpush2.msra.mxu0 0.0
        %1343 = vmatprep.subr.mxu0 0.0
        %1344 = vmatpush2.msra.mxu0 0.0
        %1345 = vmatprep.subr.mxu0 0.0
        %1346 = vmatpush2.msra.mxu0 0.0
        %1347 = vmatprep.subr.mxu0 0.0
        %1348 = vmatpush2.msra.mxu0 0.0
        %1349 = vmatprep.subr.mxu0 0.0
        %1350 = vmatpush2.msra.mxu0 0.0
        %1351 = vmatprep.subr.mxu0 0.0
        %1352 = vmatpush2.msra.mxu0 0.0
        %1353 = vmatprep.subr.mxu0 0.0
        %1354 = vmatpush2.msra.mxu0 0.0
        %1355 = vmatprep.subr.mxu0 0.0
        %1356 = vmatpush2.msra.mxu0 0.0
        %1357 = vmatprep.subr.mxu0 0.0
        %1358 = vmatpush2.msra.mxu0 0.0
        %1359 = vmatprep.mubr.f32.mxu0 0.0
        %1360 = vmatmul.mubr.f32.gmra.mxu0 %v1293
        %v1361 = vpop.f32.mrf.mxu0
        %v1362 = vadd.f32 0.0, %v1361
        %v1363 = vpop.f32.mrf.mxu0
        %1364 = vdwg.mxu0
        %v1366 = vsel %vm615, %v1285, 0
        %1368 = vmatprep.subr.mxu0 0.0
        %1369 = vmatpush1.msra.mxu0 0.0
        %1370 = vmatprep.subr.mxu0 0.0
        %1371 = vmatpush1.msra.mxu0 0.0
        %1372 = vmatprep.subr.mxu0 0.0
        %1373 = vmatpush1.msra.mxu0 0.0
        %1374 = vmatprep.subr.mxu0 0.0
        %1375 = vmatpush1.msra.mxu0 0.0
        %1376 = vmatprep.subr.mxu0 0.0
        %1377 = vmatpush1.msra.mxu0 0.0
        %1378 = vmatprep.subr.mxu0 0.0
        %1379 = vmatpush1.msra.mxu0 0.0
        %1380 = vmatprep.subr.mxu0 0.0
        %1381 = vmatpush1.msra.mxu0 0.0
        %1382 = vmatprep.subr.mxu0 0.0
        %1383 = vmatpush1.msra.mxu0 0.0
        %1384 = vmatprep.subr.mxu0 0.0
        %1385 = vmatpush1.msra.mxu0 0.0
        %1386 = vmatprep.subr.mxu0 0.0
        %1387 = vmatpush1.msra.mxu0 0.0
        %1388 = vmatprep.subr.mxu0 0.0
        %1389 = vmatpush1.msra.mxu0 0.0
        %1390 = vmatprep.subr.mxu0 0.0
        %1391 = vmatpush1.msra.mxu0 0.0
        %1392 = vmatprep.subr.mxu0 0.0
        %1393 = vmatpush1.msra.mxu0 0.0
        %1394 = vmatprep.subr.mxu0 0.0
        %1395 = vmatpush1.msra.mxu0 0.0
        %1396 = vmatprep.subr.mxu0 0.0
        %1397 = vmatpush1.msra.mxu0 0.0
        %1398 = vmatprep.subr.mxu0 0.0
        %1399 = vmatpush1.msra.mxu0 %v1289
        %1400 = vmatprep.subr.mxu0 0.0
        %1401 = vmatpush2.msra.mxu0 0.0
        %1402 = vmatprep.subr.mxu0 0.0
        %1403 = vmatpush2.msra.mxu0 0.0
        %1404 = vmatprep.subr.mxu0 0.0
        %1405 = vmatpush2.msra.mxu0 0.0
        %1406 = vmatprep.subr.mxu0 0.0
        %1407 = vmatpush2.msra.mxu0 0.0
        %1408 = vmatprep.subr.mxu0 0.0
        %1409 = vmatpush2.msra.mxu0 0.0
        %1410 = vmatprep.subr.mxu0 0.0
        %1411 = vmatpush2.msra.mxu0 0.0
        %1412 = vmatprep.subr.mxu0 0.0
        %1413 = vmatpush2.msra.mxu0 0.0
        %1414 = vmatprep.subr.mxu0 0.0
        %1415 = vmatpush2.msra.mxu0 0.0
        %1416 = vmatprep.subr.mxu0 0.0
        %1417 = vmatpush2.msra.mxu0 0.0
        %1418 = vmatprep.subr.mxu0 0.0
        %1419 = vmatpush2.msra.mxu0 0.0
        %1420 = vmatprep.subr.mxu0 0.0
        %1421 = vmatpush2.msra.mxu0 0.0
        %1422 = vmatprep.subr.mxu0 0.0
        %1423 = vmatpush2.msra.mxu0 0.0
        %1424 = vmatprep.subr.mxu0 0.0
        %1425 = vmatpush2.msra.mxu0 0.0
        %1426 = vmatprep.subr.mxu0 0.0
        %1427 = vmatpush2.msra.mxu0 0.0
        %1428 = vmatprep.subr.mxu0 0.0
        %1429 = vmatpush2.msra.mxu0 0.0
        %1430 = vmatprep.subr.mxu0 0.0
        %1431 = vmatpush2.msra.mxu0 0.0
        %1432 = vmatprep.mubr.f32.mxu0 0.0
        %1433 = vmatmul.mubr.f32.gmra.mxu0 %v1366
        %v1434 = vpop.f32.mrf.mxu0
        %v1435 = vadd.f32 0.0, %v1434
        %v1436 = vpop.f32.mrf.mxu0
        %1437 = vdwg.mxu0
        %v1439 = vsel %vm615, %v1286, 0
        %1441 = vmatprep.subr.mxu0 0.0
        %1442 = vmatpush1.msra.mxu0 0.0
        %1443 = vmatprep.subr.mxu0 0.0
        %1444 = vmatpush1.msra.mxu0 0.0
        %1445 = vmatprep.subr.mxu0 0.0
        %1446 = vmatpush1.msra.mxu0 0.0
        %1447 = vmatprep.subr.mxu0 0.0
        %1448 = vmatpush1.msra.mxu0 0.0
        %1449 = vmatprep.subr.mxu0 0.0
        %1450 = vmatpush1.msra.mxu0 0.0
        %1451 = vmatprep.subr.mxu0 0.0
        %1452 = vmatpush1.msra.mxu0 0.0
        %1453 = vmatprep.subr.mxu0 0.0
        %1454 = vmatpush1.msra.mxu0 0.0
        %1455 = vmatprep.subr.mxu0 0.0
        %1456 = vmatpush1.msra.mxu0 0.0
        %1457 = vmatprep.subr.mxu0 0.0
        %1458 = vmatpush1.msra.mxu0 0.0
        %1459 = vmatprep.subr.mxu0 0.0
        %1460 = vmatpush1.msra.mxu0 0.0
        %1461 = vmatprep.subr.mxu0 0.0
        %1462 = vmatpush1.msra.mxu0 0.0
        %1463 = vmatprep.subr.mxu0 0.0
        %1464 = vmatpush1.msra.mxu0 0.0
        %1465 = vmatprep.subr.mxu0 0.0
        %1466 = vmatpush1.msra.mxu0 0.0
        %1467 = vmatprep.subr.mxu0 0.0
        %1468 = vmatpush1.msra.mxu0 0.0
        %1469 = vmatprep.subr.mxu0 0.0
        %1470 = vmatpush1.msra.mxu0 0.0
        %1471 = vmatprep.subr.mxu0 0.0
        %1472 = vmatpush1.msra.mxu0 %v1290
        %1473 = vmatprep.subr.mxu0 0.0
        %1474 = vmatpush2.msra.mxu0 0.0
        %1475 = vmatprep.subr.mxu0 0.0
        %1476 = vmatpush2.msra.mxu0 0.0
        %1477 = vmatprep.subr.mxu0 0.0
        %1478 = vmatpush2.msra.mxu0 0.0
        %1479 = vmatprep.subr.mxu0 0.0
        %1480 = vmatpush2.msra.mxu0 0.0
        %1481 = vmatprep.subr.mxu0 0.0
        %1482 = vmatpush2.msra.mxu0 0.0
        %1483 = vmatprep.subr.mxu0 0.0
        %1484 = vmatpush2.msra.mxu0 0.0
        %1485 = vmatprep.subr.mxu0 0.0
        %1486 = vmatpush2.msra.mxu0 0.0
        %1487 = vmatprep.subr.mxu0 0.0
        %1488 = vmatpush2.msra.mxu0 0.0
        %1489 = vmatprep.subr.mxu0 0.0
        %1490 = vmatpush2.msra.mxu0 0.0
        %1491 = vmatprep.subr.mxu0 0.0
        %1492 = vmatpush2.msra.mxu0 0.0
        %1493 = vmatprep.subr.mxu0 0.0
        %1494 = vmatpush2.msra.mxu0 0.0
        %1495 = vmatprep.subr.mxu0 0.0
        %1496 = vmatpush2.msra.mxu0 0.0
        %1497 = vmatprep.subr.mxu0 0.0
        %1498 = vmatpush2.msra.mxu0 0.0
        %1499 = vmatprep.subr.mxu0 0.0
        %1500 = vmatpush2.msra.mxu0 0.0
        %1501 = vmatprep.subr.mxu0 0.0
        %1502 = vmatpush2.msra.mxu0 0.0
        %1503 = vmatprep.subr.mxu0 0.0
        %1504 = vmatpush2.msra.mxu0 0.0
        %1505 = vmatprep.mubr.f32.mxu0 0.0
        %1506 = vmatmul.mubr.f32.gmra.mxu0 %v1439
        %v1507 = vpop.f32.mrf.mxu0
        %v1508 = vadd.f32 0.0, %v1507
        %v1509 = vpop.f32.mrf.mxu0
        %1510 = vdwg.mxu0
        %v1512 = vsel %vm615, %v1287, 0
        %1514 = vmatprep.subr.mxu0 0.0
        %1515 = vmatpush1.msra.mxu0 0.0
        %1516 = vmatprep.subr.mxu0 0.0
        %1517 = vmatpush1.msra.mxu0 0.0
        %1518 = vmatprep.subr.mxu0 0.0
        %1519 = vmatpush1.msra.mxu0 0.0
        %1520 = vmatprep.subr.mxu0 0.0
        %1521 = vmatpush1.msra.mxu0 0.0
        %1522 = vmatprep.subr.mxu0 0.0
        %1523 = vmatpush1.msra.mxu0 0.0
        %1524 = vmatprep.subr.mxu0 0.0
        %1525 = vmatpush1.msra.mxu0 0.0
        %1526 = vmatprep.subr.mxu0 0.0
        %1527 = vmatpush1.msra.mxu0 0.0
        %1528 = vmatprep.subr.mxu0 0.0
        %1529 = vmatpush1.msra.mxu0 0.0
        %1530 = vmatprep.subr.mxu0 0.0
        %1531 = vmatpush1.msra.mxu0 0.0
        %1532 = vmatprep.subr.mxu0 0.0
        %1533 = vmatpush1.msra.mxu0 0.0
        %1534 = vmatprep.subr.mxu0 0.0
        %1535 = vmatpush1.msra.mxu0 0.0
        %1536 = vmatprep.subr.mxu0 0.0
        %1537 = vmatpush1.msra.mxu0 0.0
        %1538 = vmatprep.subr.mxu0 0.0
        %1539 = vmatpush1.msra.mxu0 0.0
        %1540 = vmatprep.subr.mxu0 0.0
        %1541 = vmatpush1.msra.mxu0 0.0
        %1542 = vmatprep.subr.mxu0 0.0
        %1543 = vmatpush1.msra.mxu0 0.0
        %1544 = vmatprep.subr.mxu0 0.0
        %1545 = vmatpush1.msra.mxu0 %v1291
        %1546 = vmatprep.subr.mxu0 0.0
        %1547 = vmatpush2.msra.mxu0 0.0
        %1548 = vmatprep.subr.mxu0 0.0
        %1549 = vmatpush2.msra.mxu0 0.0
        %1550 = vmatprep.subr.mxu0 0.0
        %1551 = vmatpush2.msra.mxu0 0.0
        %1552 = vmatprep.subr.mxu0 0.0
        %1553 = vmatpush2.msra.mxu0 0.0
        %1554 = vmatprep.subr.mxu0 0.0
        %1555 = vmatpush2.msra.mxu0 0.0
        %1556 = vmatprep.subr.mxu0 0.0
        %1557 = vmatpush2.msra.mxu0 0.0
        %1558 = vmatprep.subr.mxu0 0.0
        %1559 = vmatpush2.msra.mxu0 0.0
        %1560 = vmatprep.subr.mxu0 0.0
        %1561 = vmatpush2.msra.mxu0 0.0
        %1562 = vmatprep.subr.mxu0 0.0
        %1563 = vmatpush2.msra.mxu0 0.0
        %1564 = vmatprep.subr.mxu0 0.0
        %1565 = vmatpush2.msra.mxu0 0.0
        %1566 = vmatprep.subr.mxu0 0.0
        %1567 = vmatpush2.msra.mxu0 0.0
        %1568 = vmatprep.subr.mxu0 0.0
        %1569 = vmatpush2.msra.mxu0 0.0
        %1570 = vmatprep.subr.mxu0 0.0
        %1571 = vmatpush2.msra.mxu0 0.0
        %1572 = vmatprep.subr.mxu0 0.0
        %1573 = vmatpush2.msra.mxu0 0.0
        %1574 = vmatprep.subr.mxu0 0.0
        %1575 = vmatpush2.msra.mxu0 0.0
        %1576 = vmatprep.subr.mxu0 0.0
        %1577 = vmatpush2.msra.mxu0 0.0
        %1578 = vmatprep.mubr.f32.mxu0 0.0
        %1579 = vmatmul.mubr.f32.gmra.mxu0 %v1512
        %v1580 = vpop.f32.mrf.mxu0
        %v1581 = vadd.f32 0.0, %v1580
        %v1582 = vpop.f32.mrf.mxu0
        %1583 = vdwg.mxu0
        %v1584 = vsel %vm160, %v1362, 0.0
        %v1585 = vsel %vm160, %v1435, 0.0
        %v1586 = vadd.f32 %v1584, %v1585
        %v1587 = vsel %vm160, %v1508, 0.0
        %v1588 = vadd.f32 %v1586, %v1587
        %v1589 = vsel %vm160, %v1581, 0.0
        %v1590 = vadd.f32 %v1588, %v1589
        %1591 = vst.msk [vmem:[%s134] sm:$0xff] %vm160, %v1590
        %s1592 = sand.u32 %s71, 1
        %s1593 = scalar_lea.sflag [#allocation3], %s1592
        %s1594 = sand.u32 %s71, 1
        %s1595 = smul.addr %s1594, 8
        %s1596 = scalar_lea.vmem [#allocation2], %s1595
        // Predicated region
        $region29: #{attention_forward.1} parent=27 // pred_check
          %p1597 = pneg %p81
        $region30: #{attention_forward.1} parent=27 // pred_check_branch
          %1599 = sbr.rel (%p1597) target = $region32
        $region31: #{attention_forward.1} parent=27 // pred_region
          %s1601 = ssub.s32 128, 128
          %1602 = vsyncadd %s1593, %s1601
          %s1603 = smul.addr %s16, 128
          %s1604 = scalar_lea.hbm %s2, %s1603
          %s1606 = sshll.u32 %s1596, 4
          %s1607 = int_to_ptr.vmem [resolvable:$true] %s1606
          %1609 = dma.vmem_to_hbm [thread:$0]  %s1607, 128, %s1604, %s1593
        $region32: #{attention_forward.1} parent=27 // pred_fallthru
          _
      $region28: #{attention_forward.1} parent=5 // pred_fallthru
        _
      %p1610 = scmp.le.s32.totalorder 2, %s11
      // Predicated region
      $region33: #{attention_forward.1} parent=5 // pred_check
        %p1611 = pneg %p1610
      $region34: #{attention_forward.1} parent=5 // pred_check_branch
        %1613 = sbr.rel (%p1611) target = $region36
      $region35: #{attention_forward.1} parent=5 // pred_region
        %s1614 = ssub.s32 %s11, 2
        // Predicated region
        $region37: #{attention_forward.1} parent=35 // pred_check
          %p1615 = pneg %p87
        $region38: #{attention_forward.1} parent=35 // pred_check_branch
          %1617 = sbr.rel (%p1615) target = $region40
        $region39: #{attention_forward.1} parent=35 // pred_region
          %s1618 = sand.u32 %s72, 1
          %s1619 = scalar_lea.sflag [#allocation3], %s1618
          %s1620 = sand.u32 %s72, 1
          %s1621 = smul.addr %s1620, 8
          %s1622 = scalar_lea.vmem [#allocation2], %s1621
          %1623 = dma.done %s1619, 128
        $region40: #{attention_forward.1} parent=35 // pred_fallthru
          _
      $region36: #{attention_forward.1} parent=5 // pred_fallthru
        _
    $region6: #{attention_forward.1} parent=1 // loop_footer
      %s15 = sadd.s32 1, %s11
    $region7: #{attention_forward.1} parent=1 // loop_footer_branch
      %10 = sbr.rel target = $region3
    $region8: #{attention_forward.1} parent=1 // loop_exit
      _
    %1624 = vsyncpa [#allocation3], 1
    %s1625 = scalar_lea.sflag [#allocation3], 1
    %1626 = vsyncpa %s1625, 1

</llo_original>
